<compile_context>
chip_gen: v5e
topology: v5e:2x2
jax: 0.10.0
libtpu: 0.0.40
codegen_flags: <defaults>
</compile_context>

<pallas_src>
import jax
import jax.numpy as jnp
from jax import lax
from jax.experimental import pallas as pl
from jax.experimental.pallas import tpu as pltpu


def _rel_attn_kernel(xf_ref, rb_ref, w_ref, b_ref, out_ref):
    """Per-batch block.

    xf_ref : (1, N, C)  tokens (x flattened, token-major), f32
    rb_ref : (1, N, C)  relative position bias (depthwise-conv output), f32
    w_ref  : (C, 3C)    fused qkv weight (y = x @ w + b convention)
    b_ref  : (1, 3C)    fused qkv bias
    out_ref: (1, C, N)  output, channel-major so the final store is lane-dense
    """
    C = w_ref.shape[0]
    xf = xf_ref[0]                                   # (N, C) f32
    rb = rb_ref[0]                                   # (N, C) f32

    # --- (2) single fused qkv projection.  MXU work here is negligible (K = C);
    # kept in f32 for accuracy of the logits downstream.
    qkv = jnp.dot(xf, w_ref[...], preferred_element_type=jnp.float32) + b_ref[...]
    q, k, v = qkv[:, :C], qkv[:, C:2 * C], qkv[:, 2 * C:]

    # --- (1) fused attention logits: q @ (k + rb)^T  ==  q@k^T + q@rb^T. ---
    kb = (k + rb).astype(jnp.bfloat16)               # (N, C) bf16   (3)
    qb = q.astype(jnp.bfloat16)                      # (N, C) bf16   (3)
    # NT dot_general (contract the channel dim of both operands): no materialized
    # transpose of either operand.
    logits = lax.dot_general(qb, kb, (((1,), (1,)), ((), ())),
                             preferred_element_type=jnp.float32)     # (N, N) f32

    # --- softmax over keys; normalization deferred (4).  Elementwise math stays
    # f32 (v5e has no bf16 VPU/EUP path).
    m = jnp.max(logits, axis=-1, keepdims=True)      # (N, 1)
    p = jnp.exp(logits - m)                          # (N, N) f32
    denom = jnp.sum(p, axis=-1, keepdims=True)       # (N, 1)

    # --- weighted sum of values: bf16 MXU operands, f32 accumulation (3). ---
    o = jnp.dot(p.astype(jnp.bfloat16), v.astype(jnp.bfloat16),
                preferred_element_type=jnp.float32)  # (N, C) f32

    # (4) deferred normalization on the small (N, C) tensor; reciprocal on the EUP.
    o = o * pl.reciprocal(denom, approx=True)

    # --- (6) lane-dense store: write (C, N), i.e. N (>=128, multiple of 128 for the
    # test shape) in the lane dimension instead of C=8.
    out_ref[0] = o.T.astype(out_ref.dtype)


def relative_attention(x, params, kernel_size=3):
    """x: (B, C, H, W) float32 (NCHW, PyTorch convention). Returns (B, C, H, W)."""
    B, C, H, W = x.shape
    N = H * W
    pad = kernel_size // 2

    # Token-major activation (layout glue only).
    x_flat = jnp.transpose(x.reshape(B, C, N), (0, 2, 1))            # (B, N, C)

    # (5) Relative position bias = depthwise conv, computed here with one XLA conv
    # (review option (a)) and shipped token-major.  This removes the 9 narrow-lane,
    # unaligned-slice relayouts from the kernel, and x_pad is no longer shipped (7).
    w_oihw = jnp.transpose(params["conv_w"], (2, 0, 1))[:, None]     # (C, 1, K, K)
    rb = lax.conv_general_dilated(
        x, w_oihw, window_strides=(1, 1), padding=((pad, pad), (pad, pad)),
        feature_group_count=C, dimension_numbers=("NCHW", "OIHW", "NCHW"))
    rb = rb + params["conv_b"][None, :, None, None]
    rb_flat = jnp.transpose(rb.reshape(B, C, N), (0, 2, 1))          # (B, N, C)

    w_qkv = params["w_qkv"]                                          # (C, 3C)
    b_qkv = params["b_qkv"].reshape(1, 3 * C)                        # (1, 3C)

    # NOTE: for this module's regime (N = H*W up to a few thousand) the full (N, N)
    # logits comfortably fit VMEM on v5e/v6e/v7x.  For much larger N, add a
    # query-block grid axis (flash-style streaming over keys); for very large B,
    # block several batches per grid step to amortize the ~0.35us per-step overhead.
    grid_spec = pltpu.PrefetchScalarGridSpec(
        num_scalar_prefetch=0,
        grid=(B,),
        in_specs=[
            pl.BlockSpec((1, N, C), lambda i: (i, 0, 0)),            # x_flat
            pl.BlockSpec((1, N, C), lambda i: (i, 0, 0)),            # relative bias
            pl.BlockSpec((C, 3 * C), lambda i: (0, 0)),              # fused qkv weight
            pl.BlockSpec((1, 3 * C), lambda i: (0, 0)),              # fused qkv bias
        ],
        out_specs=pl.BlockSpec((1, C, N), lambda i: (i, 0, 0)),      # channel-major out
    )

    out_cn = pl.pallas_call(
        _rel_attn_kernel,
        out_shape=jax.ShapeDtypeStruct((B, C, N), x.dtype),
        grid_spec=grid_spec,
        compiler_params=pltpu.CompilerParams(
            dimension_semantics=("parallel",),           # (9) batch steps split across TCs
            vmem_limit_bytes=32 * 1024 * 1024),          # (8) explicit VMEM budget
    )(x_flat, rb_flat, w_qkv, b_qkv)

    # (B, C, N) -> (B, C, H, W): pure reshape, no transpose needed (6).
    return out_cn.reshape(B, C, H, W)


def init_params(key, C, kernel_size=3):
    """Deterministic synthetic parameters matching the PyTorch module shapes."""
    k1, k2, k3, k4 = jax.random.split(key, 4)
    # nn.Linear(C, 3C): weight (3C, C), bias (3C,). Stored transposed as (C, 3C).
    w_qkv = jax.random.normal(k1, (C, 3 * C), jnp.float32) * (1.0 / jnp.sqrt(C))
    b_qkv = jax.random.normal(k2, (3 * C,), jnp.float32) * 0.02
    # nn.Conv2d(C, C, K, groups=C): weight (C, 1, K, K), bias (C,). Stored as (K, K, C).
    conv_w = jax.random.normal(k3, (kernel_size, kernel_size, C), jnp.float32) * 0.1
    conv_b = jax.random.normal(k4, (C,), jnp.float32) * 0.02
    return {"w_qkv": w_qkv, "b_qkv": b_qkv, "conv_w": conv_w, "conv_b": conv_b}


def _reference(x, params, kernel_size=3):
    """Pure-JAX f32 reference replicating the PyTorch forward exactly."""
    B, C, H, W = x.shape
    N = H * W
    pad = kernel_size // 2
    x_flat = jnp.transpose(x.reshape(B, C, N), (0, 2, 1))            # (B, N, C)
    qkv = x_flat @ params["w_qkv"] + params["b_qkv"]                 # (B, N, 3C)
    q, k, v = qkv[..., :C], qkv[..., C:2 * C], qkv[..., 2 * C:]
    w_oihw = jnp.transpose(params["conv_w"], (2, 0, 1))[:, None]     # (C, 1, K, K)
    rb = lax.conv_general_dilated(
        x, w_oihw, window_strides=(1, 1), padding=((pad, pad), (pad, pad)),
        feature_group_count=C, dimension_numbers=("NCHW", "OIHW", "NCHW"))
    rb = rb + params["conv_b"][None, :, None, None]
    rb = jnp.transpose(rb.reshape(B, C, N), (0, 2, 1))               # (B, N, C)
    attn = jnp.einsum("bnc,bmc->bnm", q, k) + jnp.einsum("bnc,bmc->bnm", q, rb)
    attn = jax.nn.softmax(attn, axis=-1)
    out_flat = jnp.einsum("bnm,bmc->bnc", attn, v)
    return jnp.transpose(out_flat, (0, 2, 1)).reshape(B, C, H, W)


if __name__ == "__main__":
    key = jax.random.PRNGKey(0)
    kx, kp = jax.random.split(key)

    B, C, H, W = 2, 8, 16, 16
    x = jax.random.normal(kx, (B, C, H, W), jnp.float32)
    params = init_params(kp, C, kernel_size=3)

    out = relative_attention(x, params, kernel_size=3)
    out = jax.block_until_ready(out)

    ref = _reference(x, params, kernel_size=3)
    assert out.shape == (B, C, H, W)

    # bf16 MXU operands + approximate reciprocal (per perf review) introduce ~1e-2
    # level absolute error vs. the pure-f32 reference; tolerances set accordingly.
    rel_err = jnp.linalg.norm(out - ref) / jnp.linalg.norm(ref)
    assert rel_err < 3e-2, f"relative error too large: {rel_err}"
    assert jnp.allclose(out, ref, atol=1e-1, rtol=1e-1), "mismatch vs reference"

    print("KERNEL_OK")
</pallas_src>

<mosaic_0001>
module attributes {stable_mosaic.version = 11 : i64} {
  func.func @_rel_attn_kernel(%arg0: i32, %arg1: memref<1x256x8xf32, #tpu.memory_space<vmem>>, %arg2: memref<1x256x8xf32, #tpu.memory_space<vmem>>, %arg3: memref<8x24xf32, #tpu.memory_space<vmem>>, %arg4: memref<1x24xf32, #tpu.memory_space<vmem>>, %arg5: memref<1x8x256xf32, #tpu.memory_space<vmem>>) attributes {dimension_semantics = [#tpu.dimension_semantics<parallel>], iteration_bounds = array<i64: 2>, scalar_prefetch = 0 : i64, scratch_operands = 0 : i64, tpu.core_type = #tpu.core_type<tc>, window_params = [{transform_indices = @transform_0, window_bounds = array<i64: 1, 256, 8>}, {transform_indices = @transform_1, window_bounds = array<i64: 1, 256, 8>}, {pipeline_mode = #tpu.pipeline_mode<synchronous>, transform_indices = @transform_2, window_bounds = array<i64: 8, 24>}, {pipeline_mode = #tpu.pipeline_mode<synchronous>, transform_indices = @transform_3, window_bounds = array<i64: 1, 24>}, {transform_indices = @transform_4, window_bounds = array<i64: 1, 8, 256>}]} {
    %c0 = arith.constant 0 : index
    %c0_0 = arith.constant 0 : index
    %c0_1 = arith.constant 0 : index
    %0 = vector.load %arg1[%c0, %c0_0, %c0_1] : memref<1x256x8xf32, #tpu.memory_space<vmem>>, vector<1x256x8xf32>
    %1 = vector.shape_cast %0 : vector<1x256x8xf32> to vector<256x8xf32>
    %c0_2 = arith.constant 0 : index
    %c0_3 = arith.constant 0 : index
    %c0_4 = arith.constant 0 : index
    %2 = vector.load %arg2[%c0_2, %c0_3, %c0_4] : memref<1x256x8xf32, #tpu.memory_space<vmem>>, vector<1x256x8xf32>
    %3 = vector.shape_cast %2 : vector<1x256x8xf32> to vector<256x8xf32>
    %c0_5 = arith.constant 0 : index
    %c0_6 = arith.constant 0 : index
    %4 = vector.load %arg3[%c0_5, %c0_6] : memref<8x24xf32, #tpu.memory_space<vmem>>, vector<8x24xf32>
    %cst = arith.constant dense<0.000000e+00> : vector<256x24xf32>
    %5 = tpu.matmul %1, %4, %cst {dimension_numbers = #tpu.dot_dimension_numbers<[1], [0], [0], [1], [0, 0, 1, 1], [], []>} : vector<256x8xf32>, vector<8x24xf32>, vector<256x24xf32> -> vector<256x24xf32>
    %c0_7 = arith.constant 0 : index
    %c0_8 = arith.constant 0 : index
    %6 = vector.load %arg4[%c0_7, %c0_8] : memref<1x24xf32, #tpu.memory_space<vmem>>, vector<1x24xf32>
    %7 = vector.broadcast %6 : vector<1x24xf32> to vector<256x24xf32>
    %8 = arith.addf %5, %7 : vector<256x24xf32>
    %9 = vector.extract_strided_slice %8 {offsets = [0, 0], sizes = [256, 8], strides = [1, 1]} : vector<256x24xf32> to vector<256x8xf32>
    %10 = vector.extract_strided_slice %8 {offsets = [0, 8], sizes = [256, 8], strides = [1, 1]} : vector<256x24xf32> to vector<256x8xf32>
    %11 = vector.extract_strided_slice %8 {offsets = [0, 16], sizes = [256, 8], strides = [1, 1]} : vector<256x24xf32> to vector<256x8xf32>
    %12 = arith.addf %10, %3 : vector<256x8xf32>
    %13 = arith.truncf %12 : vector<256x8xf32> to vector<256x8xbf16>
    %14 = arith.truncf %9 : vector<256x8xf32> to vector<256x8xbf16>
    %cst_9 = arith.constant dense<0.000000e+00> : vector<256x256xf32>
    %15 = tpu.matmul %14, %13, %cst_9 {dimension_numbers = #tpu.dot_dimension_numbers<[1], [1], [0], [0], [0, 0, 1, 0], [], []>} : vector<256x8xbf16>, vector<256x8xbf16>, vector<256x256xf32> -> vector<256x256xf32>
    %cst_10 = arith.constant dense<0xFF800000> : vector<256xf32>
    %16 = vector.multi_reduction <maximumf>, %15, %cst_10 [1] : vector<256x256xf32> to vector<256xf32>
    %17 = vector.shape_cast %16 : vector<256xf32> to vector<256x1xf32>
    %18 = vector.broadcast %17 : vector<256x1xf32> to vector<256x256xf32>
    %19 = arith.subf %15, %18 : vector<256x256xf32>
    %20 = math.exp %19 : vector<256x256xf32>
    %cst_11 = arith.constant dense<0.000000e+00> : vector<256xf32>
    %21 = vector.multi_reduction <add>, %20, %cst_11 [1] : vector<256x256xf32> to vector<256xf32>
    %22 = vector.shape_cast %21 : vector<256xf32> to vector<256x1xf32>
    %23 = arith.truncf %20 : vector<256x256xf32> to vector<256x256xbf16>
    %24 = arith.truncf %11 : vector<256x8xf32> to vector<256x8xbf16>
    %cst_12 = arith.constant dense<0.000000e+00> : vector<256x8xf32>
    %25 = tpu.matmul %23, %24, %cst_12 {dimension_numbers = #tpu.dot_dimension_numbers<[1], [0], [0], [1], [0, 0, 1, 1], [], []>} : vector<256x256xbf16>, vector<256x8xbf16>, vector<256x8xf32> -> vector<256x8xf32>
    %26 = tpu.reciprocal %22 {approx = true} : vector<256x1xf32> -> vector<256x1xf32>
    %27 = vector.broadcast %26 : vector<256x1xf32> to vector<256x8xf32>
    %28 = arith.mulf %25, %27 : vector<256x8xf32>
    %29 = tpu.transpose %28, [1, 0] : vector<256x8xf32> -> vector<8x256xf32>
    %c0_13 = arith.constant 0 : index
    %c0_14 = arith.constant 0 : index
    %c0_15 = arith.constant 0 : index
    %30 = vector.load %arg5[%c0_13, %c0_14, %c0_15] : memref<1x8x256xf32, #tpu.memory_space<vmem>>, vector<1x8x256xf32>
    %31 = vector.shape_cast %30 : vector<1x8x256xf32> to vector<8x256xf32>
    %32 = vector.shape_cast %29 : vector<8x256xf32> to vector<1x8x256xf32>
    tpu.vector_store %arg5[%c0_13, %c0_14, %c0_15], %32 {strides = array<i32>} : memref<1x8x256xf32, #tpu.memory_space<vmem>>, vector<1x8x256xf32>,
    return
  }
  func.func @transform_0(%arg0: i32) -> (i32, i32, i32) {
    %c0_i32 = arith.constant 0 : i32
    %c0_i32_0 = arith.constant 0 : i32
    %c0_i32_1 = arith.constant 0 : i32
    return %arg0, %c0_i32, %c0_i32_0 : i32, i32, i32
  }
  func.func @transform_1(%arg0: i32) -> (i32, i32, i32) {
    %c0_i32 = arith.constant 0 : i32
    %c0_i32_0 = arith.constant 0 : i32
    %c0_i32_1 = arith.constant 0 : i32
    return %arg0, %c0_i32, %c0_i32_0 : i32, i32, i32
  }
  func.func @transform_2(%arg0: i32) -> (i32, i32) {
    %c0_i32 = arith.constant 0 : i32
    %c0_i32_0 = arith.constant 0 : i32
    %c0_i32_1 = arith.constant 0 : i32
    return %c0_i32, %c0_i32_0 : i32, i32
  }
  func.func @transform_3(%arg0: i32) -> (i32, i32) {
    %c0_i32 = arith.constant 0 : i32
    %c0_i32_0 = arith.constant 0 : i32
    %c0_i32_1 = arith.constant 0 : i32
    return %c0_i32, %c0_i32_0 : i32, i32
  }
  func.func @transform_4(%arg0: i32) -> (i32, i32, i32) {
    %c0_i32 = arith.constant 0 : i32
    %c0_i32_0 = arith.constant 0 : i32
    %c0_i32_1 = arith.constant 0 : i32
    return %arg0, %c0_i32, %c0_i32_0 : i32, i32, i32
  }
}

</mosaic_0001>

<llo_original>
// kernel: tpu_custom_call.1
$region0: #{tpu_custom_call.1}
  #allocation0 [shape = 'u32[]', space=smem, size = 0x4, offset = 0x4, fixed_abs, tag = 'smem constant byte address 0x4 - core index']
  #allocation1 [shape = 'u32[72,128]{1,0:T(1,128)}', space=vmem, size = 0x9000, scoped, tag = 'internal scratch']
  %s0 = inlined_call_operand.vmem [shape: f32[2,256,8], index: 0, kind: input, shape index: {}]
  %s1 = inlined_call_operand.vmem [shape: f32[2,256,8], index: 1, kind: input, shape index: {}]
  %s2 = inlined_call_operand.vmem [shape: f32[8,24], index: 2, kind: input, shape index: {}]
  %s3 = inlined_call_operand.vmem [shape: f32[1,24], index: 3, kind: input, shape index: {}]
  %s4 = inlined_call_operand.hbm [shape: f32[2,8,256], index: 4, kind: output, shape index: {}]
  %s5 = sld [smem:[#allocation0]]
  $region49: #{tpu_custom_call.1} parent=0
    _
  %s7 = ssub.s32 1, %s5
  %s8 = scalar_select 0, %s7, %s5
  $region1: #{tpu_custom_call.1} parent=0
    #allocation2 [shape = 'u8[16384]{0}', space=vmem, size = 0x4000, scoped, tag = 'output window, operand 0']
    #allocation3 [shape = 's32[2]{0}', space=sflag, size = 0x8, scoped, tag = 'scoped memory for tpu_custom_call.1']
    %9 = vsyncpa [#allocation3], 0
    %s10 = scalar_lea.sflag [#allocation3], 1
    %11 = vsyncpa %s10, 0
    loop: start=0, step=1, limit=4
    $region2: #{tpu_custom_call.1} parent=1 // loop_pre_header
      _
    $region3: #{tpu_custom_call.1} parent=1 // loop_header
      %s13 = sphi 0, %s17
      %p14 = scmp.ge.s32.totalorder %s13, 4
      %s23 = sphi 0, %s25
      %s26 = sphi 0, %s23
      %s27 = sphi 0, %s26
      %s43 = sphi 0, %s27
      %s49 = sphi 0, %s51
      %s52 = sphi 0, %s49
      %s53 = sphi 0, %s52
      %s69 = sphi 0, %s53
      %s73 = sphi 0, %s73
      %s75 = sphi 0, %s73
      %s76 = sphi 0, %s75
      %s90 = sphi 0, %s76
      %s94 = sphi 0, %s94
      %s96 = sphi 0, %s94
      %s97 = sphi 0, %s96
      %s111 = sphi 0, %s97
      %s117 = sphi 0, %s119
      %s120 = sphi 0, %s117
      %s121 = sphi 0, %s120
      %s137 = sphi 0, %s121
    $region4: #{tpu_custom_call.1} parent=1 // loop_header_branch
      %16 = sbr.rel (%p14) target = $region8
    $region5: #{tpu_custom_call.1} parent=1 // loop_body
      %s18 = ssub.s32 %s13, 1
      %s19 = ssub.s32 %s13, 2
      %s20 = sadd.s32 %s13, 1
      %s21 = ssub.s32 %s13, %s20
      %p22 = scmp.eq.s32.totalorder %s21, 0
      %s24 = sadd.s32 %s23, 1
      %s25 = scalar_select %p22, %s23, %s24
      %p28 = pneg %p22
      %p29 = scmp.eq.s32.totalorder %s13, 1
      %p30 = por %p28, %p29
      %p31 = scmp.ne.s32.totalorder %s23, %s26
      %p32 = scmp.eq.s32.totalorder %s13, 0
      %p33 = por %p31, %p32
      %p34 = scmp.ne.s32.totalorder %s23, %s26
      %p35 = scmp.eq.s32.totalorder %s18, 1
      %p36 = por %p34, %p35
      %p37 = scmp.ne.s32.totalorder %s26, %s27
      %p38 = scmp.eq.s32.totalorder %s18, 0
      %p39 = por %p37, %p38
      %p40 = scmp.ne.s32.totalorder %s26, %s27
      %p41 = scmp.eq.s32.totalorder %s19, 1
      %p42 = por %p40, %p41
      %p44 = scmp.ne.s32.totalorder %s27, %s43
      %p45 = scmp.eq.s32.totalorder %s19, 0
      %p46 = por %p44, %p45
      %s47 = ssub.s32 %s13, %s20
      %p48 = scmp.eq.s32.totalorder %s47, 0
      %s50 = sadd.s32 %s49, 1
      %s51 = scalar_select %p48, %s49, %s50
      %p54 = pneg %p48
      %p55 = scmp.eq.s32.totalorder %s13, 1
      %p56 = por %p54, %p55
      %p57 = scmp.ne.s32.totalorder %s49, %s52
      %p58 = scmp.eq.s32.totalorder %s13, 0
      %p59 = por %p57, %p58
      %p60 = scmp.ne.s32.totalorder %s49, %s52
      %p61 = scmp.eq.s32.totalorder %s18, 1
      %p62 = por %p60, %p61
      %p63 = scmp.ne.s32.totalorder %s52, %s53
      %p64 = scmp.eq.s32.totalorder %s18, 0
      %p65 = por %p63, %p64
      %p66 = scmp.ne.s32.totalorder %s52, %s53
      %p67 = scmp.eq.s32.totalorder %s19, 1
      %p68 = por %p66, %p67
      %p70 = scmp.ne.s32.totalorder %s53, %s69
      %p71 = scmp.eq.s32.totalorder %s19, 0
      %p72 = por %p70, %p71
      %s74 = sadd.s32 %s73, 1
      %p77 = scmp.eq.s32.totalorder %s13, 1
      %p78 = scmp.ne.s32.totalorder %s73, %s75
      %p79 = scmp.eq.s32.totalorder %s13, 0
      %p80 = por %p78, %p79
      %p81 = scmp.ne.s32.totalorder %s73, %s75
      %p82 = scmp.eq.s32.totalorder %s18, 1
      %p83 = por %p81, %p82
      %p84 = scmp.ne.s32.totalorder %s75, %s76
      %p85 = scmp.eq.s32.totalorder %s18, 0
      %p86 = por %p84, %p85
      %p87 = scmp.ne.s32.totalorder %s75, %s76
      %p88 = scmp.eq.s32.totalorder %s19, 1
      %p89 = por %p87, %p88
      %p91 = scmp.ne.s32.totalorder %s76, %s90
      %p92 = scmp.eq.s32.totalorder %s19, 0
      %p93 = por %p91, %p92
      %s95 = sadd.s32 %s94, 1
      %p98 = scmp.eq.s32.totalorder %s13, 1
      %p99 = scmp.ne.s32.totalorder %s94, %s96
      %p100 = scmp.eq.s32.totalorder %s13, 0
      %p101 = por %p99, %p100
      %p102 = scmp.ne.s32.totalorder %s94, %s96
      %p103 = scmp.eq.s32.totalorder %s18, 1
      %p104 = por %p102, %p103
      %p105 = scmp.ne.s32.totalorder %s96, %s97
      %p106 = scmp.eq.s32.totalorder %s18, 0
      %p107 = por %p105, %p106
      %p108 = scmp.ne.s32.totalorder %s96, %s97
      %p109 = scmp.eq.s32.totalorder %s19, 1
      %p110 = por %p108, %p109
      %p112 = scmp.ne.s32.totalorder %s97, %s111
      %p113 = scmp.eq.s32.totalorder %s19, 0
      %p114 = por %p112, %p113
      %s115 = ssub.s32 %s13, %s20
      %p116 = scmp.eq.s32.totalorder %s115, 0
      %s118 = sadd.s32 %s117, 1
      %s119 = scalar_select %p116, %s117, %s118
      %p122 = pneg %p116
      %p123 = scmp.eq.s32.totalorder %s13, 1
      %p124 = por %p122, %p123
      %p125 = scmp.ne.s32.totalorder %s117, %s120
      %p126 = scmp.eq.s32.totalorder %s13, 0
      %p127 = por %p125, %p126
      %p128 = scmp.ne.s32.totalorder %s117, %s120
      %p129 = scmp.eq.s32.totalorder %s18, 1
      %p130 = por %p128, %p129
      %p131 = scmp.ne.s32.totalorder %s120, %s121
      %p132 = scmp.eq.s32.totalorder %s18, 0
      %p133 = por %p131, %p132
      %p134 = scmp.ne.s32.totalorder %s120, %s121
      %p135 = scmp.eq.s32.totalorder %s19, 1
      %p136 = por %p134, %p135
      %p138 = scmp.ne.s32.totalorder %s121, %s137
      %p139 = scmp.eq.s32.totalorder %s19, 0
      %p140 = por %p138, %p139
      %p141 = scmp.le.s32.totalorder 1, %s13
      %p142 = scmp.lt.s32.totalorder %s13, 3
      %p143 = pnand %p141, %p142
      %p144 = pneg %p143
      // Predicated region
      $region9: #{tpu_custom_call.1} parent=5 // pred_check
        _
      $region10: #{tpu_custom_call.1} parent=5 // pred_check_branch
        %146 = sbr.rel (%p143) target = $region12
      $region11: #{tpu_custom_call.1} parent=5 // pred_region
        %s147 = ssub.s32 %s13, 1
        // Predicated region
        $region13: #{tpu_custom_call.1} parent=11 // pred_check
          %p148 = pneg %p86
        $region14: #{tpu_custom_call.1} parent=11 // pred_check_branch
          %150 = sbr.rel (%p148) target = $region16
        $region15: #{tpu_custom_call.1} parent=11 // pred_region
          _
        $region16: #{tpu_custom_call.1} parent=11 // pred_fallthru
          _
        // Predicated region
        $region17: #{tpu_custom_call.1} parent=11 // pred_check
          %p151 = pneg %p107
        $region18: #{tpu_custom_call.1} parent=11 // pred_check_branch
          %153 = sbr.rel (%p151) target = $region20
        $region19: #{tpu_custom_call.1} parent=11 // pred_region
          _
        $region20: #{tpu_custom_call.1} parent=11 // pred_fallthru
          _
      $region12: #{tpu_custom_call.1} parent=5 // pred_fallthru
        _
      %p154 = scmp.lt.s32.totalorder %s13, 2
      // Predicated region
      $region21: #{tpu_custom_call.1} parent=5 // pred_check
        %p155 = pneg %p154
      $region22: #{tpu_custom_call.1} parent=5 // pred_check_branch
        %157 = sbr.rel (%p155) target = $region24
      $region23: #{tpu_custom_call.1} parent=5 // pred_region
        // Predicated region
        $region25: #{tpu_custom_call.1} parent=23 // pred_check
          %p158 = pneg %p33
        $region26: #{tpu_custom_call.1} parent=23 // pred_check_branch
          %160 = sbr.rel (%p158) target = $region28
        $region27: #{tpu_custom_call.1} parent=23 // pred_region
          %p161 = scmp.lt.s32.totalorder %s13, 1
          %s162 = scalar_select %p161, %s13, 1
          %s163 = smul.addr %s162, 32
          %s164 = smul.addr %s163, 8
          %s165 = scalar_lea.vmem %s0, %s164
        $region28: #{tpu_custom_call.1} parent=23 // pred_fallthru
          _
        // Predicated region
        $region29: #{tpu_custom_call.1} parent=23 // pred_check
          %p166 = pneg %p59
        $region30: #{tpu_custom_call.1} parent=23 // pred_check_branch
          %168 = sbr.rel (%p166) target = $region32
        $region31: #{tpu_custom_call.1} parent=23 // pred_region
          %p169 = scmp.lt.s32.totalorder %s13, 1
          %s170 = scalar_select %p169, %s13, 1
          %s171 = smul.addr %s170, 32
          %s172 = smul.addr %s171, 8
          %s173 = scalar_lea.vmem %s1, %s172
        $region32: #{tpu_custom_call.1} parent=23 // pred_fallthru
          _
      $region24: #{tpu_custom_call.1} parent=5 // pred_fallthru
        _
      %p174 = scmp.le.s32.totalorder 1, %s13
      %p175 = scmp.lt.s32.totalorder %s13, 3
      %p176 = pnand %p174, %p175
      %p177 = pneg %p176
      // Predicated region
      $region33: #{tpu_custom_call.1} parent=5 // pred_check
        _
      $region34: #{tpu_custom_call.1} parent=5 // pred_check_branch
        %179 = sbr.rel (%p176) target = $region36
      $region35: #{tpu_custom_call.1} parent=5 // pred_region
        %s180 = ssub.s32 %s13, 1
        %p181 = scmp.lt.s32.totalorder %s18, 1
        %s182 = scalar_select %p181, %s18, 1
        %s183 = smul.addr %s182, 32
        %s184 = smul.addr %s183, 8
        %s185 = scalar_lea.vmem %s0, %s184
        %p186 = pneg %p39
        %p187 = pneg %p36
        %p188 = scmp.lt.s32.totalorder %s18, 1
        %s189 = scalar_select %p188, %s18, 1
        %s190 = smul.addr %s189, 32
        %s191 = smul.addr %s190, 8
        %s192 = scalar_lea.vmem %s1, %s191
        %p193 = pneg %p65
        %p194 = pneg %p62
        %p195 = pneg %p86
        %p196 = pneg %p83
        %p197 = pneg %p107
        %p198 = pneg %p104
        %p199 = pneg %p133
        %p200 = pneg %p130
        %s201 = sand.u32 %s120, 1
        %s202 = scalar_lea.sflag [#allocation3], %s201
        %s203 = sand.u32 %s120, 1
        %s204 = smul.addr %s203, 16
        %s205 = scalar_lea.vmem [#allocation2], %s204
        %p206 = scmp.lt.s32.totalorder %s18, 1
        %s207 = scalar_select %p206, %s18, 1
        %s208 = smul.addr %s207, 32
        %s209 = smul.addr %s208, 8
        %s210 = scalar_lea.vmem %s0, %s209
        %p211 = scmp.lt.s32.totalorder %s18, 1
        %s212 = scalar_select %p211, %s18, 1
        %s213 = smul.addr %s212, 32
        %s214 = smul.addr %s213, 8
        %s215 = scalar_lea.vmem %s1, %s214
        %v216 = vld [vmem:[%s210] sm:$0xff]
        %v217 = vld [vmem:[%s210 + $0x8] sm:$0xff]
        %v218 = vld [vmem:[%s210 + $0x10] sm:$0xff]
        %v219 = vld [vmem:[%s210 + $0x18] sm:$0xff]
        %v220 = vld [vmem:[%s210 + $0x20] sm:$0xff]
        %v221 = vld [vmem:[%s210 + $0x28] sm:$0xff]
        %v222 = vld [vmem:[%s210 + $0x30] sm:$0xff]
        %v223 = vld [vmem:[%s210 + $0x38] sm:$0xff]
        %v224 = vld [vmem:[%s210 + $0x40] sm:$0xff]
        %v225 = vld [vmem:[%s210 + $0x48] sm:$0xff]
        %v226 = vld [vmem:[%s210 + $0x50] sm:$0xff]
        %v227 = vld [vmem:[%s210 + $0x58] sm:$0xff]
        %v228 = vld [vmem:[%s210 + $0x60] sm:$0xff]
        %v229 = vld [vmem:[%s210 + $0x68] sm:$0xff]
        %v230 = vld [vmem:[%s210 + $0x70] sm:$0xff]
        %v231 = vld [vmem:[%s210 + $0x78] sm:$0xff]
        %v232 = vld [vmem:[%s210 + $0x80] sm:$0xff]
        %v233 = vld [vmem:[%s210 + $0x88] sm:$0xff]
        %v234 = vld [vmem:[%s210 + $0x90] sm:$0xff]
        %v235 = vld [vmem:[%s210 + $0x98] sm:$0xff]
        %v236 = vld [vmem:[%s210 + $0xa0] sm:$0xff]
        %v237 = vld [vmem:[%s210 + $0xa8] sm:$0xff]
        %v238 = vld [vmem:[%s210 + $0xb0] sm:$0xff]
        %v239 = vld [vmem:[%s210 + $0xb8] sm:$0xff]
        %v240 = vld [vmem:[%s210 + $0xc0] sm:$0xff]
        %v241 = vld [vmem:[%s210 + $0xc8] sm:$0xff]
        %v242 = vld [vmem:[%s210 + $0xd0] sm:$0xff]
        %v243 = vld [vmem:[%s210 + $0xd8] sm:$0xff]
        %v244 = vld [vmem:[%s210 + $0xe0] sm:$0xff]
        %v245 = vld [vmem:[%s210 + $0xe8] sm:$0xff]
        %v246 = vld [vmem:[%s210 + $0xf0] sm:$0xff]
        %v247 = vld [vmem:[%s210 + $0xf8] sm:$0xff]
        %v248 = vld [vmem:[%s215] sm:$0xff]
        %v249 = vld [vmem:[%s215 + $0x8] sm:$0xff]
        %v250 = vld [vmem:[%s215 + $0x10] sm:$0xff]
        %v251 = vld [vmem:[%s215 + $0x18] sm:$0xff]
        %v252 = vld [vmem:[%s215 + $0x20] sm:$0xff]
        %v253 = vld [vmem:[%s215 + $0x28] sm:$0xff]
        %v254 = vld [vmem:[%s215 + $0x30] sm:$0xff]
        %v255 = vld [vmem:[%s215 + $0x38] sm:$0xff]
        %v256 = vld [vmem:[%s215 + $0x40] sm:$0xff]
        %v257 = vld [vmem:[%s215 + $0x48] sm:$0xff]
        %v258 = vld [vmem:[%s215 + $0x50] sm:$0xff]
        %v259 = vld [vmem:[%s215 + $0x58] sm:$0xff]
        %v260 = vld [vmem:[%s215 + $0x60] sm:$0xff]
        %v261 = vld [vmem:[%s215 + $0x68] sm:$0xff]
        %v262 = vld [vmem:[%s215 + $0x70] sm:$0xff]
        %v263 = vld [vmem:[%s215 + $0x78] sm:$0xff]
        %v264 = vld [vmem:[%s215 + $0x80] sm:$0xff]
        %v265 = vld [vmem:[%s215 + $0x88] sm:$0xff]
        %v266 = vld [vmem:[%s215 + $0x90] sm:$0xff]
        %v267 = vld [vmem:[%s215 + $0x98] sm:$0xff]
        %v268 = vld [vmem:[%s215 + $0xa0] sm:$0xff]
        %v269 = vld [vmem:[%s215 + $0xa8] sm:$0xff]
        %v270 = vld [vmem:[%s215 + $0xb0] sm:$0xff]
        %v271 = vld [vmem:[%s215 + $0xb8] sm:$0xff]
        %v272 = vld [vmem:[%s215 + $0xc0] sm:$0xff]
        %v273 = vld [vmem:[%s215 + $0xc8] sm:$0xff]
        %v274 = vld [vmem:[%s215 + $0xd0] sm:$0xff]
        %v275 = vld [vmem:[%s215 + $0xd8] sm:$0xff]
        %v276 = vld [vmem:[%s215 + $0xe0] sm:$0xff]
        %v277 = vld [vmem:[%s215 + $0xe8] sm:$0xff]
        %v278 = vld [vmem:[%s215 + $0xf0] sm:$0xff]
        %v279 = vld [vmem:[%s215 + $0xf8] sm:$0xff]
        %v280 = vld [vmem:[%s2] sm:$0xff]
        %v281 = vld [vmem:[%s3] sm:$0x1]
        %v283 = vperm.slane %v281, 0
        %vm285 = vcmask 64512
        %v287 = vsel %vm285, %v216, 0
        %v290 = vsel %vm285, %v217, 0
        %v293 = vsel %vm285, %v218, 0
        %v296 = vsel %vm285, %v219, 0
        %v299 = vsel %vm285, %v220, 0
        %v302 = vsel %vm285, %v221, 0
        %v305 = vsel %vm285, %v222, 0
        %v308 = vsel %vm285, %v223, 0
        %v311 = vsel %vm285, %v224, 0
        %v314 = vsel %vm285, %v225, 0
        %v317 = vsel %vm285, %v226, 0
        %v320 = vsel %vm285, %v227, 0
        %v323 = vsel %vm285, %v228, 0
        %v326 = vsel %vm285, %v229, 0
        %v329 = vsel %vm285, %v230, 0
        %v332 = vsel %vm285, %v231, 0
        %v335 = vsel %vm285, %v232, 0
        %v338 = vsel %vm285, %v233, 0
        %v341 = vsel %vm285, %v234, 0
        %v344 = vsel %vm285, %v235, 0
        %v347 = vsel %vm285, %v236, 0
        %v350 = vsel %vm285, %v237, 0
        %v353 = vsel %vm285, %v238, 0
        %v356 = vsel %vm285, %v239, 0
        %v359 = vsel %vm285, %v240, 0
        %v362 = vsel %vm285, %v241, 0
        %v365 = vsel %vm285, %v242, 0
        %v368 = vsel %vm285, %v243, 0
        %v371 = vsel %vm285, %v244, 0
        %v374 = vsel %vm285, %v245, 0
        %v377 = vsel %vm285, %v246, 0
        %v380 = vsel %vm285, %v247, 0
        %382 = vmatpush.msra.mxu0 0.0
        %383 = vmatpush.msra.mxu0 0.0
        %384 = vmatpush.msra.mxu0 0.0
        %385 = vmatpush.msra.mxu0 0.0
        %386 = vmatpush.msra.mxu0 0.0
        %387 = vmatpush.msra.mxu0 0.0
        %388 = vmatpush.msra.mxu0 0.0
        %389 = vmatpush.msra.mxu0 0.0
        %390 = vmatpush.msra.mxu0 0.0
        %391 = vmatpush.msra.mxu0 0.0
        %392 = vmatpush.msra.mxu0 0.0
        %393 = vmatpush.msra.mxu0 0.0
        %394 = vmatpush.msra.mxu0 0.0
        %395 = vmatpush.msra.mxu0 0.0
        %396 = vmatpush.msra.mxu0 0.0
        %397 = vmatpush.msra.mxu0 %v280
        %398 = vmatmul.f32.gmra.mxu0 %v287
        %v399 = vpop.f32.mrf.mxu0
        %v400 = vadd.f32 %v283, %v399
        %401 = vmatmul.f32.gmra.mxu0 %v290
        %v402 = vpop.f32.mrf.mxu0
        %v403 = vadd.f32 %v283, %v402
        %404 = vmatmul.f32.gmra.mxu0 %v293
        %v405 = vpop.f32.mrf.mxu0
        %v406 = vadd.f32 %v283, %v405
        %407 = vmatmul.f32.gmra.mxu0 %v296
        %v408 = vpop.f32.mrf.mxu0
        %v409 = vadd.f32 %v283, %v408
        %410 = vmatmul.f32.gmra.mxu0 %v299
        %v411 = vpop.f32.mrf.mxu0
        %v412 = vadd.f32 %v283, %v411
        %413 = vmatmul.f32.gmra.mxu0 %v302
        %v414 = vpop.f32.mrf.mxu0
        %v415 = vadd.f32 %v283, %v414
        %416 = vmatmul.f32.gmra.mxu0 %v305
        %v417 = vpop.f32.mrf.mxu0
        %v418 = vadd.f32 %v283, %v417
        %419 = vmatmul.f32.gmra.mxu0 %v308
        %v420 = vpop.f32.mrf.mxu0
        %v421 = vadd.f32 %v283, %v420
        %422 = vmatmul.f32.gmra.mxu0 %v311
        %v423 = vpop.f32.mrf.mxu0
        %v424 = vadd.f32 %v283, %v423
        %425 = vmatmul.f32.gmra.mxu0 %v314
        %v426 = vpop.f32.mrf.mxu0
        %v427 = vadd.f32 %v283, %v426
        %428 = vmatmul.f32.gmra.mxu0 %v317
        %v429 = vpop.f32.mrf.mxu0
        %v430 = vadd.f32 %v283, %v429
        %431 = vmatmul.f32.gmra.mxu0 %v320
        %v432 = vpop.f32.mrf.mxu0
        %v433 = vadd.f32 %v283, %v432
        %434 = vmatmul.f32.gmra.mxu0 %v323
        %v435 = vpop.f32.mrf.mxu0
        %v436 = vadd.f32 %v283, %v435
        %437 = vmatmul.f32.gmra.mxu0 %v326
        %v438 = vpop.f32.mrf.mxu0
        %v439 = vadd.f32 %v283, %v438
        %440 = vmatmul.f32.gmra.mxu0 %v329
        %v441 = vpop.f32.mrf.mxu0
        %v442 = vadd.f32 %v283, %v441
        %443 = vmatmul.f32.gmra.mxu0 %v332
        %v444 = vpop.f32.mrf.mxu0
        %v445 = vadd.f32 %v283, %v444
        %446 = vmatmul.f32.gmra.mxu0 %v335
        %v447 = vpop.f32.mrf.mxu0
        %v448 = vadd.f32 %v283, %v447
        %449 = vmatmul.f32.gmra.mxu0 %v338
        %v450 = vpop.f32.mrf.mxu0
        %v451 = vadd.f32 %v283, %v450
        %452 = vmatmul.f32.gmra.mxu0 %v341
        %v453 = vpop.f32.mrf.mxu0
        %v454 = vadd.f32 %v283, %v453
        %455 = vmatmul.f32.gmra.mxu0 %v344
        %v456 = vpop.f32.mrf.mxu0
        %v457 = vadd.f32 %v283, %v456
        %458 = vmatmul.f32.gmra.mxu0 %v347
        %v459 = vpop.f32.mrf.mxu0
        %v460 = vadd.f32 %v283, %v459
        %461 = vmatmul.f32.gmra.mxu0 %v350
        %v462 = vpop.f32.mrf.mxu0
        %v463 = vadd.f32 %v283, %v462
        %464 = vmatmul.f32.gmra.mxu0 %v353
        %v465 = vpop.f32.mrf.mxu0
        %v466 = vadd.f32 %v283, %v465
        %467 = vmatmul.f32.gmra.mxu0 %v356
        %v468 = vpop.f32.mrf.mxu0
        %v469 = vadd.f32 %v283, %v468
        %470 = vmatmul.f32.gmra.mxu0 %v359
        %v471 = vpop.f32.mrf.mxu0
        %v472 = vadd.f32 %v283, %v471
        %473 = vmatmul.f32.gmra.mxu0 %v362
        %v474 = vpop.f32.mrf.mxu0
        %v475 = vadd.f32 %v283, %v474
        %476 = vmatmul.f32.gmra.mxu0 %v365
        %v477 = vpop.f32.mrf.mxu0
        %v478 = vadd.f32 %v283, %v477
        %479 = vmatmul.f32.gmra.mxu0 %v368
        %v480 = vpop.f32.mrf.mxu0
        %v481 = vadd.f32 %v283, %v480
        %482 = vmatmul.f32.gmra.mxu0 %v371
        %v483 = vpop.f32.mrf.mxu0
        %v484 = vadd.f32 %v283, %v483
        %485 = vmatmul.f32.gmra.mxu0 %v374
        %v486 = vpop.f32.mrf.mxu0
        %v487 = vadd.f32 %v283, %v486
        %488 = vmatmul.f32.gmra.mxu0 %v377
        %v489 = vpop.f32.mrf.mxu0
        %v490 = vadd.f32 %v283, %v489
        %491 = vmatmul.f32.gmra.mxu0 %v380
        %v492 = vpop.f32.mrf.mxu0
        %v493 = vadd.f32 %v283, %v492
        %494 = vdwg.mxu0
        %527 = vrot.lane.b32.xlu0 %v248, 8
        %v528 = vpop.permute.xlu0 %527
        %529 = vrot.lane.b32.xlu0 %v249, 8
        %v530 = vpop.permute.xlu0 %529
        %531 = vrot.lane.b32.xlu0 %v250, 8
        %v532 = vpop.permute.xlu0 %531
        %533 = vrot.lane.b32.xlu0 %v251, 8
        %v534 = vpop.permute.xlu0 %533
        %535 = vrot.lane.b32.xlu0 %v252, 8
        %v536 = vpop.permute.xlu0 %535
        %537 = vrot.lane.b32.xlu0 %v253, 8
        %v538 = vpop.permute.xlu0 %537
        %539 = vrot.lane.b32.xlu0 %v254, 8
        %v540 = vpop.permute.xlu0 %539
        %541 = vrot.lane.b32.xlu0 %v255, 8
        %v542 = vpop.permute.xlu0 %541
        %543 = vrot.lane.b32.xlu0 %v256, 8
        %v544 = vpop.permute.xlu0 %543
        %545 = vrot.lane.b32.xlu0 %v257, 8
        %v546 = vpop.permute.xlu0 %545
        %547 = vrot.lane.b32.xlu0 %v258, 8
        %v548 = vpop.permute.xlu0 %547
        %549 = vrot.lane.b32.xlu0 %v259, 8
        %v550 = vpop.permute.xlu0 %549
        %551 = vrot.lane.b32.xlu0 %v260, 8
        %v552 = vpop.permute.xlu0 %551
        %553 = vrot.lane.b32.xlu0 %v261, 8
        %v554 = vpop.permute.xlu0 %553
        %555 = vrot.lane.b32.xlu0 %v262, 8
        %v556 = vpop.permute.xlu0 %555
        %557 = vrot.lane.b32.xlu0 %v263, 8
        %v558 = vpop.permute.xlu0 %557
        %559 = vrot.lane.b32.xlu0 %v264, 8
        %v560 = vpop.permute.xlu0 %559
        %561 = vrot.lane.b32.xlu0 %v265, 8
        %v562 = vpop.permute.xlu0 %561
        %563 = vrot.lane.b32.xlu0 %v266, 8
        %v564 = vpop.permute.xlu0 %563
        %565 = vrot.lane.b32.xlu0 %v267, 8
        %v566 = vpop.permute.xlu0 %565
        %567 = vrot.lane.b32.xlu0 %v268, 8
        %v568 = vpop.permute.xlu0 %567
        %569 = vrot.lane.b32.xlu0 %v269, 8
        %v570 = vpop.permute.xlu0 %569
        %571 = vrot.lane.b32.xlu0 %v270, 8
        %v572 = vpop.permute.xlu0 %571
        %573 = vrot.lane.b32.xlu0 %v271, 8
        %v574 = vpop.permute.xlu0 %573
        %575 = vrot.lane.b32.xlu0 %v272, 8
        %v576 = vpop.permute.xlu0 %575
        %577 = vrot.lane.b32.xlu0 %v273, 8
        %v578 = vpop.permute.xlu0 %577
        %579 = vrot.lane.b32.xlu0 %v274, 8
        %v580 = vpop.permute.xlu0 %579
        %581 = vrot.lane.b32.xlu0 %v275, 8
        %v582 = vpop.permute.xlu0 %581
        %583 = vrot.lane.b32.xlu0 %v276, 8
        %v584 = vpop.permute.xlu0 %583
        %585 = vrot.lane.b32.xlu0 %v277, 8
        %v586 = vpop.permute.xlu0 %585
        %587 = vrot.lane.b32.xlu0 %v278, 8
        %v588 = vpop.permute.xlu0 %587
        %589 = vrot.lane.b32.xlu0 %v279, 8
        %v590 = vpop.permute.xlu0 %589
        %v623 = vadd.f32 %v400, %v528
        %v624 = vadd.f32 %v403, %v530
        %v625 = vadd.f32 %v406, %v532
        %v626 = vadd.f32 %v409, %v534
        %v627 = vadd.f32 %v412, %v536
        %v628 = vadd.f32 %v415, %v538
        %v629 = vadd.f32 %v418, %v540
        %v630 = vadd.f32 %v421, %v542
        %v631 = vadd.f32 %v424, %v544
        %v632 = vadd.f32 %v427, %v546
        %v633 = vadd.f32 %v430, %v548
        %v634 = vadd.f32 %v433, %v550
        %v635 = vadd.f32 %v436, %v552
        %v636 = vadd.f32 %v439, %v554
        %v637 = vadd.f32 %v442, %v556
        %v638 = vadd.f32 %v445, %v558
        %v639 = vadd.f32 %v448, %v560
        %v640 = vadd.f32 %v451, %v562
        %v641 = vadd.f32 %v454, %v564
        %v642 = vadd.f32 %v457, %v566
        %v643 = vadd.f32 %v460, %v568
        %v644 = vadd.f32 %v463, %v570
        %v645 = vadd.f32 %v466, %v572
        %v646 = vadd.f32 %v469, %v574
        %v647 = vadd.f32 %v472, %v576
        %v648 = vadd.f32 %v475, %v578
        %v649 = vadd.f32 %v478, %v580
        %v650 = vadd.f32 %v481, %v582
        %v651 = vadd.f32 %v484, %v584
        %v652 = vadd.f32 %v487, %v586
        %v653 = vadd.f32 %v490, %v588
        %v654 = vadd.f32 %v493, %v590
        %v655 = vpack.c.bf16 %v624, %v623
        %v656 = vpack.c.bf16 %v626, %v625
        %v657 = vpack.c.bf16 %v628, %v627
        %v658 = vpack.c.bf16 %v630, %v629
        %v659 = vpack.c.bf16 %v632, %v631
        %v660 = vpack.c.bf16 %v634, %v633
        %v661 = vpack.c.bf16 %v636, %v635
        %v662 = vpack.c.bf16 %v638, %v637
        %v663 = vpack.c.bf16 %v640, %v639
        %v664 = vpack.c.bf16 %v642, %v641
        %v665 = vpack.c.bf16 %v644, %v643
        %v666 = vpack.c.bf16 %v646, %v645
        %v667 = vpack.c.bf16 %v648, %v647
        %v668 = vpack.c.bf16 %v650, %v649
        %v669 = vpack.c.bf16 %v652, %v651
        %v670 = vpack.c.bf16 %v654, %v653
        %v671 = vpack.c.bf16 %v403, %v400
        %v672 = vpack.c.bf16 %v409, %v406
        %v673 = vpack.c.bf16 %v415, %v412
        %v674 = vpack.c.bf16 %v421, %v418
        %v675 = vpack.c.bf16 %v427, %v424
        %v676 = vpack.c.bf16 %v433, %v430
        %v677 = vpack.c.bf16 %v439, %v436
        %v678 = vpack.c.bf16 %v445, %v442
        %v679 = vpack.c.bf16 %v451, %v448
        %v680 = vpack.c.bf16 %v457, %v454
        %v681 = vpack.c.bf16 %v463, %v460
        %v682 = vpack.c.bf16 %v469, %v466
        %v683 = vpack.c.bf16 %v475, %v472
        %v684 = vpack.c.bf16 %v481, %v478
        %v685 = vpack.c.bf16 %v487, %v484
        %v686 = vpack.c.bf16 %v493, %v490
        %703 = vrot.lane.b32.xlu0 %v655, 120
        %v704 = vpop.permute.xlu0 %703
        %705 = vrot.lane.b32.xlu0 %v656, 120
        %v706 = vpop.permute.xlu0 %705
        %707 = vrot.lane.b32.xlu0 %v657, 120
        %v708 = vpop.permute.xlu0 %707
        %709 = vrot.lane.b32.xlu0 %v658, 120
        %v710 = vpop.permute.xlu0 %709
        %711 = vrot.lane.b32.xlu0 %v659, 120
        %v712 = vpop.permute.xlu0 %711
        %713 = vrot.lane.b32.xlu0 %v660, 120
        %v714 = vpop.permute.xlu0 %713
        %715 = vrot.lane.b32.xlu0 %v661, 120
        %v716 = vpop.permute.xlu0 %715
        %717 = vrot.lane.b32.xlu0 %v662, 120
        %v718 = vpop.permute.xlu0 %717
        %719 = vrot.lane.b32.xlu0 %v663, 120
        %v720 = vpop.permute.xlu0 %719
        %721 = vrot.lane.b32.xlu0 %v664, 120
        %v722 = vpop.permute.xlu0 %721
        %723 = vrot.lane.b32.xlu0 %v665, 120
        %v724 = vpop.permute.xlu0 %723
        %725 = vrot.lane.b32.xlu0 %v666, 120
        %v726 = vpop.permute.xlu0 %725
        %727 = vrot.lane.b32.xlu0 %v667, 120
        %v728 = vpop.permute.xlu0 %727
        %729 = vrot.lane.b32.xlu0 %v668, 120
        %v730 = vpop.permute.xlu0 %729
        %731 = vrot.lane.b32.xlu0 %v669, 120
        %v732 = vpop.permute.xlu0 %731
        %733 = vrot.lane.b32.xlu0 %v670, 120
        %v734 = vpop.permute.xlu0 %733
        %v736 = vsel %vm285, %v671, 0
        %v739 = vsel %vm285, %v672, 0
        %v742 = vsel %vm285, %v673, 0
        %v745 = vsel %vm285, %v674, 0
        %v748 = vsel %vm285, %v675, 0
        %v751 = vsel %vm285, %v676, 0
        %v754 = vsel %vm285, %v677, 0
        %v757 = vsel %vm285, %v678, 0
        %v760 = vsel %vm285, %v679, 0
        %v763 = vsel %vm285, %v680, 0
        %v766 = vsel %vm285, %v681, 0
        %v769 = vsel %vm285, %v682, 0
        %v772 = vsel %vm285, %v683, 0
        %v775 = vsel %vm285, %v684, 0
        %v778 = vsel %vm285, %v685, 0
        %v781 = vsel %vm285, %v686, 0
        %v784 = vsel %vm285, %v704, 0
        %v787 = vsel %vm285, %v706, 0
        %v790 = vsel %vm285, %v708, 0
        %v793 = vsel %vm285, %v710, 0
        %v796 = vsel %vm285, %v712, 0
        %v799 = vsel %vm285, %v714, 0
        %v802 = vsel %vm285, %v716, 0
        %v805 = vsel %vm285, %v718, 0
        %v808 = vsel %vm285, %v720, 0
        %v811 = vsel %vm285, %v722, 0
        %v814 = vsel %vm285, %v724, 0
        %v817 = vsel %vm285, %v726, 0
        %v820 = vsel %vm285, %v728, 0
        %v823 = vsel %vm285, %v730, 0
        %v826 = vsel %vm285, %v732, 0
        %v829 = vsel %vm285, %v734, 0
        %831 = vmatpush.bf16.xpose.msra.mxu0 %v805
        %832 = vmatpush.bf16.xpose.msra.mxu0 %v802
        %833 = vmatpush.bf16.xpose.msra.mxu0 %v799
        %834 = vmatpush.bf16.xpose.msra.mxu0 %v796
        %835 = vmatpush.bf16.xpose.msra.mxu0 %v793
        %836 = vmatpush.bf16.xpose.msra.mxu0 %v790
        %837 = vmatpush.bf16.xpose.msra.mxu0 %v787
        %838 = vmatpush.bf16.xpose.msra.mxu0 %v784
        %839 = vmatmul.bf16.gmra.mxu0 %v736
        %v840 = vpop.f32.mrf.mxu0
        %v841 = vadd.f32 0.0, %v840
        %v842 = vpop.f32.mrf.mxu0
        %v843 = vadd.f32 0.0, %v842
        %844 = vmatmul.bf16.gmra.mxu0 %v739
        %v845 = vpop.f32.mrf.mxu0
        %v846 = vadd.f32 0.0, %v845
        %v847 = vpop.f32.mrf.mxu0
        %v848 = vadd.f32 0.0, %v847
        %849 = vmatmul.bf16.gmra.mxu0 %v742
        %v850 = vpop.f32.mrf.mxu0
        %v851 = vadd.f32 0.0, %v850
        %v852 = vpop.f32.mrf.mxu0
        %v853 = vadd.f32 0.0, %v852
        %854 = vmatmul.bf16.gmra.mxu0 %v745
        %v855 = vpop.f32.mrf.mxu0
        %v856 = vadd.f32 0.0, %v855
        %v857 = vpop.f32.mrf.mxu0
        %v858 = vadd.f32 0.0, %v857
        %859 = vmatmul.bf16.gmra.mxu0 %v748
        %v860 = vpop.f32.mrf.mxu0
        %v861 = vadd.f32 0.0, %v860
        %v862 = vpop.f32.mrf.mxu0
        %v863 = vadd.f32 0.0, %v862
        %864 = vmatmul.bf16.gmra.mxu0 %v751
        %v865 = vpop.f32.mrf.mxu0
        %v866 = vadd.f32 0.0, %v865
        %v867 = vpop.f32.mrf.mxu0
        %v868 = vadd.f32 0.0, %v867
        %869 = vmatmul.bf16.gmra.mxu0 %v754
        %v870 = vpop.f32.mrf.mxu0
        %v871 = vadd.f32 0.0, %v870
        %v872 = vpop.f32.mrf.mxu0
        %v873 = vadd.f32 0.0, %v872
        %874 = vmatmul.bf16.gmra.mxu0 %v757
        %v875 = vpop.f32.mrf.mxu0
        %v876 = vadd.f32 0.0, %v875
        %v877 = vpop.f32.mrf.mxu0
        %v878 = vadd.f32 0.0, %v877
        %879 = vmatmul.bf16.gmra.mxu0 %v760
        %v880 = vpop.f32.mrf.mxu0
        %v881 = vadd.f32 0.0, %v880
        %v882 = vpop.f32.mrf.mxu0
        %v883 = vadd.f32 0.0, %v882
        %884 = vmatmul.bf16.gmra.mxu0 %v763
        %v885 = vpop.f32.mrf.mxu0
        %v886 = vadd.f32 0.0, %v885
        %v887 = vpop.f32.mrf.mxu0
        %v888 = vadd.f32 0.0, %v887
        %889 = vmatmul.bf16.gmra.mxu0 %v766
        %v890 = vpop.f32.mrf.mxu0
        %v891 = vadd.f32 0.0, %v890
        %v892 = vpop.f32.mrf.mxu0
        %v893 = vadd.f32 0.0, %v892
        %894 = vmatmul.bf16.gmra.mxu0 %v769
        %v895 = vpop.f32.mrf.mxu0
        %v896 = vadd.f32 0.0, %v895
        %v897 = vpop.f32.mrf.mxu0
        %v898 = vadd.f32 0.0, %v897
        %899 = vmatmul.bf16.gmra.mxu0 %v772
        %v900 = vpop.f32.mrf.mxu0
        %v901 = vadd.f32 0.0, %v900
        %v902 = vpop.f32.mrf.mxu0
        %v903 = vadd.f32 0.0, %v902
        %904 = vmatmul.bf16.gmra.mxu0 %v775
        %v905 = vpop.f32.mrf.mxu0
        %v906 = vadd.f32 0.0, %v905
        %v907 = vpop.f32.mrf.mxu0
        %v908 = vadd.f32 0.0, %v907
        %909 = vmatmul.bf16.gmra.mxu0 %v778
        %v910 = vpop.f32.mrf.mxu0
        %v911 = vadd.f32 0.0, %v910
        %v912 = vpop.f32.mrf.mxu0
        %v913 = vadd.f32 0.0, %v912
        %914 = vmatmul.bf16.gmra.mxu0 %v781
        %v915 = vpop.f32.mrf.mxu0
        %v916 = vadd.f32 0.0, %v915
        %v917 = vpop.f32.mrf.mxu0
        %v918 = vadd.f32 0.0, %v917
        %919 = vdwg.mxu0
        %920 = vmatpush.bf16.xpose.msra.mxu0 %v829
        %921 = vmatpush.bf16.xpose.msra.mxu0 %v826
        %922 = vmatpush.bf16.xpose.msra.mxu0 %v823
        %923 = vmatpush.bf16.xpose.msra.mxu0 %v820
        %924 = vmatpush.bf16.xpose.msra.mxu0 %v817
        %925 = vmatpush.bf16.xpose.msra.mxu0 %v814
        %926 = vmatpush.bf16.xpose.msra.mxu0 %v811
        %927 = vmatpush.bf16.xpose.msra.mxu0 %v808
        %928 = vmatmul.bf16.gmra.mxu0 %v736
        %v929 = vpop.f32.mrf.mxu0
        %v930 = vadd.f32 0.0, %v929
        %v931 = vpop.f32.mrf.mxu0
        %v932 = vadd.f32 0.0, %v931
        %933 = vmatmul.bf16.gmra.mxu0 %v739
        %v934 = vpop.f32.mrf.mxu0
        %v935 = vadd.f32 0.0, %v934
        %v936 = vpop.f32.mrf.mxu0
        %v937 = vadd.f32 0.0, %v936
        %938 = vmatmul.bf16.gmra.mxu0 %v742
        %v939 = vpop.f32.mrf.mxu0
        %v940 = vadd.f32 0.0, %v939
        %v941 = vpop.f32.mrf.mxu0
        %v942 = vadd.f32 0.0, %v941
        %943 = vmatmul.bf16.gmra.mxu0 %v745
        %v944 = vpop.f32.mrf.mxu0
        %v945 = vadd.f32 0.0, %v944
        %v946 = vpop.f32.mrf.mxu0
        %v947 = vadd.f32 0.0, %v946
        %948 = vmatmul.bf16.gmra.mxu0 %v748
        %v949 = vpop.f32.mrf.mxu0
        %v950 = vadd.f32 0.0, %v949
        %v951 = vpop.f32.mrf.mxu0
        %v952 = vadd.f32 0.0, %v951
        %953 = vmatmul.bf16.gmra.mxu0 %v751
        %v954 = vpop.f32.mrf.mxu0
        %v955 = vadd.f32 0.0, %v954
        %v956 = vpop.f32.mrf.mxu0
        %v957 = vadd.f32 0.0, %v956
        %958 = vmatmul.bf16.gmra.mxu0 %v754
        %v959 = vpop.f32.mrf.mxu0
        %v960 = vadd.f32 0.0, %v959
        %v961 = vpop.f32.mrf.mxu0
        %v962 = vadd.f32 0.0, %v961
        %963 = vmatmul.bf16.gmra.mxu0 %v757
        %v964 = vpop.f32.mrf.mxu0
        %v965 = vadd.f32 0.0, %v964
        %v966 = vpop.f32.mrf.mxu0
        %v967 = vadd.f32 0.0, %v966
        %968 = vmatmul.bf16.gmra.mxu0 %v760
        %v969 = vpop.f32.mrf.mxu0
        %v970 = vadd.f32 0.0, %v969
        %v971 = vpop.f32.mrf.mxu0
        %v972 = vadd.f32 0.0, %v971
        %973 = vmatmul.bf16.gmra.mxu0 %v763
        %v974 = vpop.f32.mrf.mxu0
        %v975 = vadd.f32 0.0, %v974
        %v976 = vpop.f32.mrf.mxu0
        %v977 = vadd.f32 0.0, %v976
        %978 = vmatmul.bf16.gmra.mxu0 %v766
        %v979 = vpop.f32.mrf.mxu0
        %v980 = vadd.f32 0.0, %v979
        %v981 = vpop.f32.mrf.mxu0
        %v982 = vadd.f32 0.0, %v981
        %983 = vmatmul.bf16.gmra.mxu0 %v769
        %v984 = vpop.f32.mrf.mxu0
        %v985 = vadd.f32 0.0, %v984
        %v986 = vpop.f32.mrf.mxu0
        %v987 = vadd.f32 0.0, %v986
        %988 = vmatmul.bf16.gmra.mxu0 %v772
        %v989 = vpop.f32.mrf.mxu0
        %v990 = vadd.f32 0.0, %v989
        %v991 = vpop.f32.mrf.mxu0
        %v992 = vadd.f32 0.0, %v991
        %993 = vmatmul.bf16.gmra.mxu0 %v775
        %v994 = vpop.f32.mrf.mxu0
        %v995 = vadd.f32 0.0, %v994
        %v996 = vpop.f32.mrf.mxu0
        %v997 = vadd.f32 0.0, %v996
        %998 = vmatmul.bf16.gmra.mxu0 %v778
        %v999 = vpop.f32.mrf.mxu0
        %v1000 = vadd.f32 0.0, %v999
        %v1001 = vpop.f32.mrf.mxu0
        %v1002 = vadd.f32 0.0, %v1001
        %1003 = vmatmul.bf16.gmra.mxu0 %v781
        %v1004 = vpop.f32.mrf.mxu0
        %v1005 = vadd.f32 0.0, %v1004
        %v1006 = vpop.f32.mrf.mxu0
        %v1007 = vadd.f32 0.0, %v1006
        %1008 = vdwg.mxu0
        %v1009 = vmax.f32 %v841, %v930
        %1010 = vmax.xlane.f32.xlu0 %v1009
        %v1011 = vpop.xlane.xlu0 %1010
        %v1012 = vmax.f32 %v843, %v932
        %1013 = vmax.xlane.f32.xlu0 %v1012
        %v1014 = vpop.xlane.xlu0 %1013
        %v1015 = vmax.f32 %v846, %v935
        %1016 = vmax.xlane.f32.xlu0 %v1015
        %v1017 = vpop.xlane.xlu0 %1016
        %v1018 = vmax.f32 %v848, %v937
        %1019 = vmax.xlane.f32.xlu0 %v1018
        %v1020 = vpop.xlane.xlu0 %1019
        %v1021 = vmax.f32 %v851, %v940
        %1022 = vmax.xlane.f32.xlu0 %v1021
        %v1023 = vpop.xlane.xlu0 %1022
        %v1024 = vmax.f32 %v853, %v942
        %1025 = vmax.xlane.f32.xlu0 %v1024
        %v1026 = vpop.xlane.xlu0 %1025
        %v1027 = vmax.f32 %v856, %v945
        %1028 = vmax.xlane.f32.xlu0 %v1027
        %v1029 = vpop.xlane.xlu0 %1028
        %v1030 = vmax.f32 %v858, %v947
        %1031 = vmax.xlane.f32.xlu0 %v1030
        %v1032 = vpop.xlane.xlu0 %1031
        %v1033 = vmax.f32 %v861, %v950
        %1034 = vmax.xlane.f32.xlu0 %v1033
        %v1035 = vpop.xlane.xlu0 %1034
        %v1036 = vmax.f32 %v863, %v952
        %1037 = vmax.xlane.f32.xlu0 %v1036
        %v1038 = vpop.xlane.xlu0 %1037
        %v1039 = vmax.f32 %v866, %v955
        %1040 = vmax.xlane.f32.xlu0 %v1039
        %v1041 = vpop.xlane.xlu0 %1040
        %v1042 = vmax.f32 %v868, %v957
        %1043 = vmax.xlane.f32.xlu0 %v1042
        %v1044 = vpop.xlane.xlu0 %1043
        %v1045 = vmax.f32 %v871, %v960
        %1046 = vmax.xlane.f32.xlu0 %v1045
        %v1047 = vpop.xlane.xlu0 %1046
        %v1048 = vmax.f32 %v873, %v962
        %1049 = vmax.xlane.f32.xlu0 %v1048
        %v1050 = vpop.xlane.xlu0 %1049
        %v1051 = vmax.f32 %v876, %v965
        %1052 = vmax.xlane.f32.xlu0 %v1051
        %v1053 = vpop.xlane.xlu0 %1052
        %v1054 = vmax.f32 %v878, %v967
        %1055 = vmax.xlane.f32.xlu0 %v1054
        %v1056 = vpop.xlane.xlu0 %1055
        %v1057 = vmax.f32 %v881, %v970
        %1058 = vmax.xlane.f32.xlu0 %v1057
        %v1059 = vpop.xlane.xlu0 %1058
        %v1060 = vmax.f32 %v883, %v972
        %1061 = vmax.xlane.f32.xlu0 %v1060
        %v1062 = vpop.xlane.xlu0 %1061
        %v1063 = vmax.f32 %v886, %v975
        %1064 = vmax.xlane.f32.xlu0 %v1063
        %v1065 = vpop.xlane.xlu0 %1064
        %v1066 = vmax.f32 %v888, %v977
        %1067 = vmax.xlane.f32.xlu0 %v1066
        %v1068 = vpop.xlane.xlu0 %1067
        %v1069 = vmax.f32 %v891, %v980
        %1070 = vmax.xlane.f32.xlu0 %v1069
        %v1071 = vpop.xlane.xlu0 %1070
        %v1072 = vmax.f32 %v893, %v982
        %1073 = vmax.xlane.f32.xlu0 %v1072
        %v1074 = vpop.xlane.xlu0 %1073
        %v1075 = vmax.f32 %v896, %v985
        %1076 = vmax.xlane.f32.xlu0 %v1075
        %v1077 = vpop.xlane.xlu0 %1076
        %v1078 = vmax.f32 %v898, %v987
        %1079 = vmax.xlane.f32.xlu0 %v1078
        %v1080 = vpop.xlane.xlu0 %1079
        %v1081 = vmax.f32 %v901, %v990
        %1082 = vmax.xlane.f32.xlu0 %v1081
        %v1083 = vpop.xlane.xlu0 %1082
        %v1084 = vmax.f32 %v903, %v992
        %1085 = vmax.xlane.f32.xlu0 %v1084
        %v1086 = vpop.xlane.xlu0 %1085
        %v1087 = vmax.f32 %v906, %v995
        %1088 = vmax.xlane.f32.xlu0 %v1087
        %v1089 = vpop.xlane.xlu0 %1088
        %v1090 = vmax.f32 %v908, %v997
        %1091 = vmax.xlane.f32.xlu0 %v1090
        %v1092 = vpop.xlane.xlu0 %1091
        %v1093 = vmax.f32 %v911, %v1000
        %1094 = vmax.xlane.f32.xlu0 %v1093
        %v1095 = vpop.xlane.xlu0 %1094
        %v1096 = vmax.f32 %v913, %v1002
        %1097 = vmax.xlane.f32.xlu0 %v1096
        %v1098 = vpop.xlane.xlu0 %1097
        %v1099 = vmax.f32 %v916, %v1005
        %1100 = vmax.xlane.f32.xlu0 %v1099
        %v1101 = vpop.xlane.xlu0 %1100
        %v1102 = vmax.f32 %v918, %v1007
        %1103 = vmax.xlane.f32.xlu0 %v1102
        %v1104 = vpop.xlane.xlu0 %1103
        %v1105 = vsub.f32 %v841, %v1011
        %v1106 = vsub.f32 %v930, %v1011
        %v1107 = vsub.f32 %v843, %v1014
        %v1108 = vsub.f32 %v932, %v1014
        %v1109 = vsub.f32 %v846, %v1017
        %v1110 = vsub.f32 %v935, %v1017
        %v1111 = vsub.f32 %v848, %v1020
        %v1112 = vsub.f32 %v937, %v1020
        %v1113 = vsub.f32 %v851, %v1023
        %v1114 = vsub.f32 %v940, %v1023
        %v1115 = vsub.f32 %v853, %v1026
        %v1116 = vsub.f32 %v942, %v1026
        %v1117 = vsub.f32 %v856, %v1029
        %v1118 = vsub.f32 %v945, %v1029
        %v1119 = vsub.f32 %v858, %v1032
        %v1120 = vsub.f32 %v947, %v1032
        %v1121 = vsub.f32 %v861, %v1035
        %v1122 = vsub.f32 %v950, %v1035
        %v1123 = vsub.f32 %v863, %v1038
        %v1124 = vsub.f32 %v952, %v1038
        %v1125 = vsub.f32 %v866, %v1041
        %v1126 = vsub.f32 %v955, %v1041
        %v1127 = vsub.f32 %v868, %v1044
        %v1128 = vsub.f32 %v957, %v1044
        %v1129 = vsub.f32 %v871, %v1047
        %v1130 = vsub.f32 %v960, %v1047
        %v1131 = vsub.f32 %v873, %v1050
        %v1132 = vsub.f32 %v962, %v1050
        %v1133 = vsub.f32 %v876, %v1053
        %v1134 = vsub.f32 %v965, %v1053
        %v1135 = vsub.f32 %v878, %v1056
        %v1136 = vsub.f32 %v967, %v1056
        %v1137 = vsub.f32 %v881, %v1059
        %v1138 = vsub.f32 %v970, %v1059
        %v1139 = vsub.f32 %v883, %v1062
        %v1140 = vsub.f32 %v972, %v1062
        %v1141 = vsub.f32 %v886, %v1065
        %v1142 = vsub.f32 %v975, %v1065
        %v1143 = vsub.f32 %v888, %v1068
        %v1144 = vsub.f32 %v977, %v1068
        %v1145 = vsub.f32 %v891, %v1071
        %v1146 = vsub.f32 %v980, %v1071
        %v1147 = vsub.f32 %v893, %v1074
        %v1148 = vsub.f32 %v982, %v1074
        %v1149 = vsub.f32 %v896, %v1077
        %v1150 = vsub.f32 %v985, %v1077
        %v1151 = vsub.f32 %v898, %v1080
        %v1152 = vsub.f32 %v987, %v1080
        %v1153 = vsub.f32 %v901, %v1083
        %v1154 = vsub.f32 %v990, %v1083
        %v1155 = vsub.f32 %v903, %v1086
        %v1156 = vsub.f32 %v992, %v1086
        %v1157 = vsub.f32 %v906, %v1089
        %v1158 = vsub.f32 %v995, %v1089
        %v1159 = vsub.f32 %v908, %v1092
        %v1160 = vsub.f32 %v997, %v1092
        %v1161 = vsub.f32 %v911, %v1095
        %v1162 = vsub.f32 %v1000, %v1095
        %v1163 = vsub.f32 %v913, %v1098
        %v1164 = vsub.f32 %v1002, %v1098
        %v1165 = vsub.f32 %v916, %v1101
        %v1166 = vsub.f32 %v1005, %v1101
        %v1167 = vsub.f32 %v918, %v1104
        %v1168 = vsub.f32 %v1007, %v1104
        %v1169 = vmul.f32 %v1105, 1.442695
        %v1170 = vpow.pop %v1169
        %v1171 = vmul.f32 %v1106, 1.442695
        %v1172 = vpow.pop %v1171
        %v1173 = vmul.f32 %v1107, 1.442695
        %v1174 = vpow.pop %v1173
        %v1175 = vmul.f32 %v1108, 1.442695
        %v1176 = vpow.pop %v1175
        %v1177 = vmul.f32 %v1109, 1.442695
        %v1178 = vpow.pop %v1177
        %v1179 = vmul.f32 %v1110, 1.442695
        %v1180 = vpow.pop %v1179
        %v1181 = vmul.f32 %v1111, 1.442695
        %v1182 = vpow.pop %v1181
        %v1183 = vmul.f32 %v1112, 1.442695
        %v1184 = vpow.pop %v1183
        %v1185 = vmul.f32 %v1113, 1.442695
        %v1186 = vpow.pop %v1185
        %v1187 = vmul.f32 %v1114, 1.442695
        %v1188 = vpow.pop %v1187
        %v1189 = vmul.f32 %v1115, 1.442695
        %v1190 = vpow.pop %v1189
        %v1191 = vmul.f32 %v1116, 1.442695
        %v1192 = vpow.pop %v1191
        %v1193 = vmul.f32 %v1117, 1.442695
        %v1194 = vpow.pop %v1193
        %v1195 = vmul.f32 %v1118, 1.442695
        %v1196 = vpow.pop %v1195
        %v1197 = vmul.f32 %v1119, 1.442695
        %v1198 = vpow.pop %v1197
        %v1199 = vmul.f32 %v1120, 1.442695
        %v1200 = vpow.pop %v1199
        %v1201 = vmul.f32 %v1121, 1.442695
        %v1202 = vpow.pop %v1201
        %v1203 = vmul.f32 %v1122, 1.442695
        %v1204 = vpow.pop %v1203
        %v1205 = vmul.f32 %v1123, 1.442695
        %v1206 = vpow.pop %v1205
        %v1207 = vmul.f32 %v1124, 1.442695
        %v1208 = vpow.pop %v1207
        %v1209 = vmul.f32 %v1125, 1.442695
        %v1210 = vpow.pop %v1209
        %v1211 = vmul.f32 %v1126, 1.442695
        %v1212 = vpow.pop %v1211
        %v1213 = vmul.f32 %v1127, 1.442695
        %v1214 = vpow.pop %v1213
        %v1215 = vmul.f32 %v1128, 1.442695
        %v1216 = vpow.pop %v1215
        %v1217 = vmul.f32 %v1129, 1.442695
        %v1218 = vpow.pop %v1217
        %v1219 = vmul.f32 %v1130, 1.442695
        %v1220 = vpow.pop %v1219
        %v1221 = vmul.f32 %v1131, 1.442695
        %v1222 = vpow.pop %v1221
        %v1223 = vmul.f32 %v1132, 1.442695
        %v1224 = vpow.pop %v1223
        %v1225 = vmul.f32 %v1133, 1.442695
        %v1226 = vpow.pop %v1225
        %v1227 = vmul.f32 %v1134, 1.442695
        %v1228 = vpow.pop %v1227
        %v1229 = vmul.f32 %v1135, 1.442695
        %v1230 = vpow.pop %v1229
        %v1231 = vmul.f32 %v1136, 1.442695
        %v1232 = vpow.pop %v1231
        %v1233 = vmul.f32 %v1137, 1.442695
        %v1234 = vpow.pop %v1233
        %v1235 = vmul.f32 %v1138, 1.442695
        %v1236 = vpow.pop %v1235
        %v1237 = vmul.f32 %v1139, 1.442695
        %v1238 = vpow.pop %v1237
        %v1239 = vmul.f32 %v1140, 1.442695
        %v1240 = vpow.pop %v1239
        %v1241 = vmul.f32 %v1141, 1.442695
        %v1242 = vpow.pop %v1241
        %v1243 = vmul.f32 %v1142, 1.442695
        %v1244 = vpow.pop %v1243
        %v1245 = vmul.f32 %v1143, 1.442695
        %v1246 = vpow.pop %v1245
        %v1247 = vmul.f32 %v1144, 1.442695
        %v1248 = vpow.pop %v1247
        %v1249 = vmul.f32 %v1145, 1.442695
        %v1250 = vpow.pop %v1249
        %v1251 = vmul.f32 %v1146, 1.442695
        %v1252 = vpow.pop %v1251
        %v1253 = vmul.f32 %v1147, 1.442695
        %v1254 = vpow.pop %v1253
        %v1255 = vmul.f32 %v1148, 1.442695
        %v1256 = vpow.pop %v1255
        %v1257 = vmul.f32 %v1149, 1.442695
        %v1258 = vpow.pop %v1257
        %v1259 = vmul.f32 %v1150, 1.442695
        %v1260 = vpow.pop %v1259
        %v1261 = vmul.f32 %v1151, 1.442695
        %v1262 = vpow.pop %v1261
        %v1263 = vmul.f32 %v1152, 1.442695
        %v1264 = vpow.pop %v1263
        %v1265 = vmul.f32 %v1153, 1.442695
        %v1266 = vpow.pop %v1265
        %v1267 = vmul.f32 %v1154, 1.442695
        %v1268 = vpow.pop %v1267
        %v1269 = vmul.f32 %v1155, 1.442695
        %v1270 = vpow.pop %v1269
        %v1271 = vmul.f32 %v1156, 1.442695
        %v1272 = vpow.pop %v1271
        %v1273 = vmul.f32 %v1157, 1.442695
        %v1274 = vpow.pop %v1273
        %v1275 = vmul.f32 %v1158, 1.442695
        %v1276 = vpow.pop %v1275
        %v1277 = vmul.f32 %v1159, 1.442695
        %v1278 = vpow.pop %v1277
        %v1279 = vmul.f32 %v1160, 1.442695
        %v1280 = vpow.pop %v1279
        %v1281 = vmul.f32 %v1161, 1.442695
        %v1282 = vpow.pop %v1281
        %v1283 = vmul.f32 %v1162, 1.442695
        %v1284 = vpow.pop %v1283
        %v1285 = vmul.f32 %v1163, 1.442695
        %v1286 = vpow.pop %v1285
        %v1287 = vmul.f32 %v1164, 1.442695
        %v1288 = vpow.pop %v1287
        %v1289 = vmul.f32 %v1165, 1.442695
        %v1290 = vpow.pop %v1289
        %v1291 = vmul.f32 %v1166, 1.442695
        %v1292 = vpow.pop %v1291
        %v1293 = vmul.f32 %v1167, 1.442695
        %v1294 = vpow.pop %v1293
        %v1295 = vmul.f32 %v1168, 1.442695
        %v1296 = vpow.pop %v1295
        %v1297 = vadd.f32 %v1170, %v1172
        %1298 = vadd.xlane.f32.xlu0 %v1297
        %v1299 = vpop.xlane.xlu0 %1298
        %v1300 = vadd.f32 %v1174, %v1176
        %1301 = vadd.xlane.f32.xlu0 %v1300
        %v1302 = vpop.xlane.xlu0 %1301
        %v1303 = vadd.f32 %v1178, %v1180
        %1304 = vadd.xlane.f32.xlu0 %v1303
        %v1305 = vpop.xlane.xlu0 %1304
        %v1306 = vadd.f32 %v1182, %v1184
        %1307 = vadd.xlane.f32.xlu0 %v1306
        %v1308 = vpop.xlane.xlu0 %1307
        %v1309 = vadd.f32 %v1186, %v1188
        %1310 = vadd.xlane.f32.xlu0 %v1309
        %v1311 = vpop.xlane.xlu0 %1310
        %v1312 = vadd.f32 %v1190, %v1192
        %1313 = vadd.xlane.f32.xlu0 %v1312
        %v1314 = vpop.xlane.xlu0 %1313
        %v1315 = vadd.f32 %v1194, %v1196
        %1316 = vadd.xlane.f32.xlu0 %v1315
        %v1317 = vpop.xlane.xlu0 %1316
        %v1318 = vadd.f32 %v1198, %v1200
        %1319 = vadd.xlane.f32.xlu0 %v1318
        %v1320 = vpop.xlane.xlu0 %1319
        %v1321 = vadd.f32 %v1202, %v1204
        %1322 = vadd.xlane.f32.xlu0 %v1321
        %v1323 = vpop.xlane.xlu0 %1322
        %v1324 = vadd.f32 %v1206, %v1208
        %1325 = vadd.xlane.f32.xlu0 %v1324
        %v1326 = vpop.xlane.xlu0 %1325
        %v1327 = vadd.f32 %v1210, %v1212
        %1328 = vadd.xlane.f32.xlu0 %v1327
        %v1329 = vpop.xlane.xlu0 %1328
        %v1330 = vadd.f32 %v1214, %v1216
        %1331 = vadd.xlane.f32.xlu0 %v1330
        %v1332 = vpop.xlane.xlu0 %1331
        %v1333 = vadd.f32 %v1218, %v1220
        %1334 = vadd.xlane.f32.xlu0 %v1333
        %v1335 = vpop.xlane.xlu0 %1334
        %v1336 = vadd.f32 %v1222, %v1224
        %1337 = vadd.xlane.f32.xlu0 %v1336
        %v1338 = vpop.xlane.xlu0 %1337
        %v1339 = vadd.f32 %v1226, %v1228
        %1340 = vadd.xlane.f32.xlu0 %v1339
        %v1341 = vpop.xlane.xlu0 %1340
        %v1342 = vadd.f32 %v1230, %v1232
        %1343 = vadd.xlane.f32.xlu0 %v1342
        %v1344 = vpop.xlane.xlu0 %1343
        %v1345 = vadd.f32 %v1234, %v1236
        %1346 = vadd.xlane.f32.xlu0 %v1345
        %v1347 = vpop.xlane.xlu0 %1346
        %v1348 = vadd.f32 %v1238, %v1240
        %1349 = vadd.xlane.f32.xlu0 %v1348
        %v1350 = vpop.xlane.xlu0 %1349
        %v1351 = vadd.f32 %v1242, %v1244
        %1352 = vadd.xlane.f32.xlu0 %v1351
        %v1353 = vpop.xlane.xlu0 %1352
        %v1354 = vadd.f32 %v1246, %v1248
        %1355 = vadd.xlane.f32.xlu0 %v1354
        %v1356 = vpop.xlane.xlu0 %1355
        %v1357 = vadd.f32 %v1250, %v1252
        %1358 = vadd.xlane.f32.xlu0 %v1357
        %v1359 = vpop.xlane.xlu0 %1358
        %v1360 = vadd.f32 %v1254, %v1256
        %1361 = vadd.xlane.f32.xlu0 %v1360
        %v1362 = vpop.xlane.xlu0 %1361
        %v1363 = vadd.f32 %v1258, %v1260
        %1364 = vadd.xlane.f32.xlu0 %v1363
        %v1365 = vpop.xlane.xlu0 %1364
        %v1366 = vadd.f32 %v1262, %v1264
        %1367 = vadd.xlane.f32.xlu0 %v1366
        %v1368 = vpop.xlane.xlu0 %1367
        %v1369 = vadd.f32 %v1266, %v1268
        %1370 = vadd.xlane.f32.xlu0 %v1369
        %v1371 = vpop.xlane.xlu0 %1370
        %v1372 = vadd.f32 %v1270, %v1272
        %1373 = vadd.xlane.f32.xlu0 %v1372
        %v1374 = vpop.xlane.xlu0 %1373
        %v1375 = vadd.f32 %v1274, %v1276
        %1376 = vadd.xlane.f32.xlu0 %v1375
        %v1377 = vpop.xlane.xlu0 %1376
        %v1378 = vadd.f32 %v1278, %v1280
        %1379 = vadd.xlane.f32.xlu0 %v1378
        %v1380 = vpop.xlane.xlu0 %1379
        %v1381 = vadd.f32 %v1282, %v1284
        %1382 = vadd.xlane.f32.xlu0 %v1381
        %v1383 = vpop.xlane.xlu0 %1382
        %v1384 = vadd.f32 %v1286, %v1288
        %1385 = vadd.xlane.f32.xlu0 %v1384
        %v1386 = vpop.xlane.xlu0 %1385
        %v1387 = vadd.f32 %v1290, %v1292
        %1388 = vadd.xlane.f32.xlu0 %v1387
        %v1389 = vpop.xlane.xlu0 %1388
        %v1390 = vadd.f32 %v1294, %v1296
        %1391 = vadd.xlane.f32.xlu0 %v1390
        %v1392 = vpop.xlane.xlu0 %1391
        %v1393 = vpack.c.bf16 %v1174, %v1170
        %v1394 = vpack.c.bf16 %v1176, %v1172
        %v1395 = vpack.c.bf16 %v1182, %v1178
        %v1396 = vpack.c.bf16 %v1184, %v1180
        %v1397 = vpack.c.bf16 %v1190, %v1186
        %v1398 = vpack.c.bf16 %v1192, %v1188
        %v1399 = vpack.c.bf16 %v1198, %v1194
        %v1400 = vpack.c.bf16 %v1200, %v1196
        %v1401 = vpack.c.bf16 %v1206, %v1202
        %v1402 = vpack.c.bf16 %v1208, %v1204
        %v1403 = vpack.c.bf16 %v1214, %v1210
        %v1404 = vpack.c.bf16 %v1216, %v1212
        %v1405 = vpack.c.bf16 %v1222, %v1218
        %v1406 = vpack.c.bf16 %v1224, %v1220
        %v1407 = vpack.c.bf16 %v1230, %v1226
        %v1408 = vpack.c.bf16 %v1232, %v1228
        %v1409 = vpack.c.bf16 %v1238, %v1234
        %v1410 = vpack.c.bf16 %v1240, %v1236
        %v1411 = vpack.c.bf16 %v1246, %v1242
        %v1412 = vpack.c.bf16 %v1248, %v1244
        %v1413 = vpack.c.bf16 %v1254, %v1250
        %v1414 = vpack.c.bf16 %v1256, %v1252
        %v1415 = vpack.c.bf16 %v1262, %v1258
        %v1416 = vpack.c.bf16 %v1264, %v1260
        %v1417 = vpack.c.bf16 %v1270, %v1266
        %v1418 = vpack.c.bf16 %v1272, %v1268
        %v1419 = vpack.c.bf16 %v1278, %v1274
        %v1420 = vpack.c.bf16 %v1280, %v1276
        %v1421 = vpack.c.bf16 %v1286, %v1282
        %v1422 = vpack.c.bf16 %v1288, %v1284
        %v1423 = vpack.c.bf16 %v1294, %v1290
        %v1424 = vpack.c.bf16 %v1296, %v1292
        %1441 = vrot.lane.b32.xlu0 %v671, 112
        %v1442 = vpop.permute.xlu0 %1441
        %1443 = vrot.lane.b32.xlu0 %v672, 112
        %v1444 = vpop.permute.xlu0 %1443
        %1445 = vrot.lane.b32.xlu0 %v673, 112
        %v1446 = vpop.permute.xlu0 %1445
        %1447 = vrot.lane.b32.xlu0 %v674, 112
        %v1448 = vpop.permute.xlu0 %1447
        %1449 = vrot.lane.b32.xlu0 %v675, 112
        %v1450 = vpop.permute.xlu0 %1449
        %1451 = vrot.lane.b32.xlu0 %v676, 112
        %v1452 = vpop.permute.xlu0 %1451
        %1453 = vrot.lane.b32.xlu0 %v677, 112
        %v1454 = vpop.permute.xlu0 %1453
        %1455 = vrot.lane.b32.xlu0 %v678, 112
        %v1456 = vpop.permute.xlu0 %1455
        %1457 = vrot.lane.b32.xlu0 %v679, 112
        %v1458 = vpop.permute.xlu0 %1457
        %1459 = vrot.lane.b32.xlu0 %v680, 112
        %v1460 = vpop.permute.xlu0 %1459
        %1461 = vrot.lane.b32.xlu0 %v681, 112
        %v1462 = vpop.permute.xlu0 %1461
        %1463 = vrot.lane.b32.xlu0 %v682, 112
        %v1464 = vpop.permute.xlu0 %1463
        %1465 = vrot.lane.b32.xlu0 %v683, 112
        %v1466 = vpop.permute.xlu0 %1465
        %1467 = vrot.lane.b32.xlu0 %v684, 112
        %v1468 = vpop.permute.xlu0 %1467
        %1469 = vrot.lane.b32.xlu0 %v685, 112
        %v1470 = vpop.permute.xlu0 %1469
        %1471 = vrot.lane.b32.xlu0 %v686, 112
        %v1472 = vpop.permute.xlu0 %1471
        %1489 = vmatpush.bf16.msra.mxu0 %v1456
        %1490 = vmatpush.bf16.msra.mxu0 %v1454
        %1491 = vmatpush.bf16.msra.mxu0 %v1452
        %1492 = vmatpush.bf16.msra.mxu0 %v1450
        %1493 = vmatpush.bf16.msra.mxu0 %v1448
        %1494 = vmatpush.bf16.msra.mxu0 %v1446
        %1495 = vmatpush.bf16.msra.mxu0 %v1444
        %1496 = vmatpush.bf16.msra.mxu0 %v1442
        %1497 = vmatmul.bf16.gmra.mxu0 %v1393
        %v1498 = vpop.f32.mrf.mxu0
        %v1499 = vadd.f32 0.0, %v1498
        %v1500 = vpop.f32.mrf.mxu0
        %v1501 = vadd.f32 0.0, %v1500
        %1502 = vmatmul.bf16.gmra.mxu0 %v1395
        %v1503 = vpop.f32.mrf.mxu0
        %v1504 = vadd.f32 0.0, %v1503
        %v1505 = vpop.f32.mrf.mxu0
        %v1506 = vadd.f32 0.0, %v1505
        %1507 = vmatmul.bf16.gmra.mxu0 %v1397
        %v1508 = vpop.f32.mrf.mxu0
        %v1509 = vadd.f32 0.0, %v1508
        %v1510 = vpop.f32.mrf.mxu0
        %v1511 = vadd.f32 0.0, %v1510
        %1512 = vmatmul.bf16.gmra.mxu0 %v1399
        %v1513 = vpop.f32.mrf.mxu0
        %v1514 = vadd.f32 0.0, %v1513
        %v1515 = vpop.f32.mrf.mxu0
        %v1516 = vadd.f32 0.0, %v1515
        %1517 = vmatmul.bf16.gmra.mxu0 %v1401
        %v1518 = vpop.f32.mrf.mxu0
        %v1519 = vadd.f32 0.0, %v1518
        %v1520 = vpop.f32.mrf.mxu0
        %v1521 = vadd.f32 0.0, %v1520
        %1522 = vmatmul.bf16.gmra.mxu0 %v1403
        %v1523 = vpop.f32.mrf.mxu0
        %v1524 = vadd.f32 0.0, %v1523
        %v1525 = vpop.f32.mrf.mxu0
        %v1526 = vadd.f32 0.0, %v1525
        %1527 = vmatmul.bf16.gmra.mxu0 %v1405
        %v1528 = vpop.f32.mrf.mxu0
        %v1529 = vadd.f32 0.0, %v1528
        %v1530 = vpop.f32.mrf.mxu0
        %v1531 = vadd.f32 0.0, %v1530
        %1532 = vmatmul.bf16.gmra.mxu0 %v1407
        %v1533 = vpop.f32.mrf.mxu0
        %v1534 = vadd.f32 0.0, %v1533
        %v1535 = vpop.f32.mrf.mxu0
        %v1536 = vadd.f32 0.0, %v1535
        %1537 = vmatmul.bf16.gmra.mxu0 %v1409
        %v1538 = vpop.f32.mrf.mxu0
        %v1539 = vadd.f32 0.0, %v1538
        %v1540 = vpop.f32.mrf.mxu0
        %v1541 = vadd.f32 0.0, %v1540
        %1542 = vmatmul.bf16.gmra.mxu0 %v1411
        %v1543 = vpop.f32.mrf.mxu0
        %v1544 = vadd.f32 0.0, %v1543
        %v1545 = vpop.f32.mrf.mxu0
        %v1546 = vadd.f32 0.0, %v1545
        %1547 = vmatmul.bf16.gmra.mxu0 %v1413
        %v1548 = vpop.f32.mrf.mxu0
        %v1549 = vadd.f32 0.0, %v1548
        %v1550 = vpop.f32.mrf.mxu0
        %v1551 = vadd.f32 0.0, %v1550
        %1552 = vmatmul.bf16.gmra.mxu0 %v1415
        %v1553 = vpop.f32.mrf.mxu0
        %v1554 = vadd.f32 0.0, %v1553
        %v1555 = vpop.f32.mrf.mxu0
        %v1556 = vadd.f32 0.0, %v1555
        %1557 = vmatmul.bf16.gmra.mxu0 %v1417
        %v1558 = vpop.f32.mrf.mxu0
        %v1559 = vadd.f32 0.0, %v1558
        %v1560 = vpop.f32.mrf.mxu0
        %v1561 = vadd.f32 0.0, %v1560
        %1562 = vmatmul.bf16.gmra.mxu0 %v1419
        %v1563 = vpop.f32.mrf.mxu0
        %v1564 = vadd.f32 0.0, %v1563
        %v1565 = vpop.f32.mrf.mxu0
        %v1566 = vadd.f32 0.0, %v1565
        %1567 = vmatmul.bf16.gmra.mxu0 %v1421
        %v1568 = vpop.f32.mrf.mxu0
        %v1569 = vadd.f32 0.0, %v1568
        %v1570 = vpop.f32.mrf.mxu0
        %v1571 = vadd.f32 0.0, %v1570
        %1572 = vmatmul.bf16.gmra.mxu0 %v1423
        %v1573 = vpop.f32.mrf.mxu0
        %v1574 = vadd.f32 0.0, %v1573
        %v1575 = vpop.f32.mrf.mxu0
        %v1576 = vadd.f32 0.0, %v1575
        %1577 = vdwg.mxu0
        %1578 = vmatpush.bf16.msra.mxu0 %v1472
        %1579 = vmatpush.bf16.msra.mxu0 %v1470
        %1580 = vmatpush.bf16.msra.mxu0 %v1468
        %1581 = vmatpush.bf16.msra.mxu0 %v1466
        %1582 = vmatpush.bf16.msra.mxu0 %v1464
        %1583 = vmatpush.bf16.msra.mxu0 %v1462
        %1584 = vmatpush.bf16.msra.mxu0 %v1460
        %1585 = vmatpush.bf16.msra.mxu0 %v1458
        %1586 = vmatmul.bf16.gmra.mxu0 %v1394
        %v1587 = vpop.f32.mrf.mxu0
        %v1588 = vadd.f32 %v1499, %v1587
        %v1589 = vpop.f32.mrf.mxu0
        %v1590 = vadd.f32 %v1501, %v1589
        %1591 = vmatmul.bf16.gmra.mxu0 %v1396
        %v1592 = vpop.f32.mrf.mxu0
        %v1593 = vadd.f32 %v1504, %v1592
        %v1594 = vpop.f32.mrf.mxu0
        %v1595 = vadd.f32 %v1506, %v1594
        %1596 = vmatmul.bf16.gmra.mxu0 %v1398
        %v1597 = vpop.f32.mrf.mxu0
        %v1598 = vadd.f32 %v1509, %v1597
        %v1599 = vpop.f32.mrf.mxu0
        %v1600 = vadd.f32 %v1511, %v1599
        %1601 = vmatmul.bf16.gmra.mxu0 %v1400
        %v1602 = vpop.f32.mrf.mxu0
        %v1603 = vadd.f32 %v1514, %v1602
        %v1604 = vpop.f32.mrf.mxu0
        %v1605 = vadd.f32 %v1516, %v1604
        %1606 = vmatmul.bf16.gmra.mxu0 %v1402
        %v1607 = vpop.f32.mrf.mxu0
        %v1608 = vadd.f32 %v1519, %v1607
        %v1609 = vpop.f32.mrf.mxu0
        %v1610 = vadd.f32 %v1521, %v1609
        %1611 = vmatmul.bf16.gmra.mxu0 %v1404
        %v1612 = vpop.f32.mrf.mxu0
        %v1613 = vadd.f32 %v1524, %v1612
        %v1614 = vpop.f32.mrf.mxu0
        %v1615 = vadd.f32 %v1526, %v1614
        %1616 = vmatmul.bf16.gmra.mxu0 %v1406
        %v1617 = vpop.f32.mrf.mxu0
        %v1618 = vadd.f32 %v1529, %v1617
        %v1619 = vpop.f32.mrf.mxu0
        %v1620 = vadd.f32 %v1531, %v1619
        %1621 = vmatmul.bf16.gmra.mxu0 %v1408
        %v1622 = vpop.f32.mrf.mxu0
        %v1623 = vadd.f32 %v1534, %v1622
        %v1624 = vpop.f32.mrf.mxu0
        %v1625 = vadd.f32 %v1536, %v1624
        %1626 = vmatmul.bf16.gmra.mxu0 %v1410
        %v1627 = vpop.f32.mrf.mxu0
        %v1628 = vadd.f32 %v1539, %v1627
        %v1629 = vpop.f32.mrf.mxu0
        %v1630 = vadd.f32 %v1541, %v1629
        %1631 = vmatmul.bf16.gmra.mxu0 %v1412
        %v1632 = vpop.f32.mrf.mxu0
        %v1633 = vadd.f32 %v1544, %v1632
        %v1634 = vpop.f32.mrf.mxu0
        %v1635 = vadd.f32 %v1546, %v1634
        %1636 = vmatmul.bf16.gmra.mxu0 %v1414
        %v1637 = vpop.f32.mrf.mxu0
        %v1638 = vadd.f32 %v1549, %v1637
        %v1639 = vpop.f32.mrf.mxu0
        %v1640 = vadd.f32 %v1551, %v1639
        %1641 = vmatmul.bf16.gmra.mxu0 %v1416
        %v1642 = vpop.f32.mrf.mxu0
        %v1643 = vadd.f32 %v1554, %v1642
        %v1644 = vpop.f32.mrf.mxu0
        %v1645 = vadd.f32 %v1556, %v1644
        %1646 = vmatmul.bf16.gmra.mxu0 %v1418
        %v1647 = vpop.f32.mrf.mxu0
        %v1648 = vadd.f32 %v1559, %v1647
        %v1649 = vpop.f32.mrf.mxu0
        %v1650 = vadd.f32 %v1561, %v1649
        %1651 = vmatmul.bf16.gmra.mxu0 %v1420
        %v1652 = vpop.f32.mrf.mxu0
        %v1653 = vadd.f32 %v1564, %v1652
        %v1654 = vpop.f32.mrf.mxu0
        %v1655 = vadd.f32 %v1566, %v1654
        %1656 = vmatmul.bf16.gmra.mxu0 %v1422
        %v1657 = vpop.f32.mrf.mxu0
        %v1658 = vadd.f32 %v1569, %v1657
        %v1659 = vpop.f32.mrf.mxu0
        %v1660 = vadd.f32 %v1571, %v1659
        %1661 = vmatmul.bf16.gmra.mxu0 %v1424
        %v1662 = vpop.f32.mrf.mxu0
        %v1663 = vadd.f32 %v1574, %v1662
        %v1664 = vpop.f32.mrf.mxu0
        %v1665 = vadd.f32 %v1576, %v1664
        %1666 = vdwg.mxu0
        %v1667 = vrcp.pop %v1299
        %v1668 = vrcp.pop %v1302
        %v1669 = vrcp.pop %v1305
        %v1670 = vrcp.pop %v1308
        %v1671 = vrcp.pop %v1311
        %v1672 = vrcp.pop %v1314
        %v1673 = vrcp.pop %v1317
        %v1674 = vrcp.pop %v1320
        %v1675 = vrcp.pop %v1323
        %v1676 = vrcp.pop %v1326
        %v1677 = vrcp.pop %v1329
        %v1678 = vrcp.pop %v1332
        %v1679 = vrcp.pop %v1335
        %v1680 = vrcp.pop %v1338
        %v1681 = vrcp.pop %v1341
        %v1682 = vrcp.pop %v1344
        %v1683 = vrcp.pop %v1347
        %v1684 = vrcp.pop %v1350
        %v1685 = vrcp.pop %v1353
        %v1686 = vrcp.pop %v1356
        %v1687 = vrcp.pop %v1359
        %v1688 = vrcp.pop %v1362
        %v1689 = vrcp.pop %v1365
        %v1690 = vrcp.pop %v1368
        %v1691 = vrcp.pop %v1371
        %v1692 = vrcp.pop %v1374
        %v1693 = vrcp.pop %v1377
        %v1694 = vrcp.pop %v1380
        %v1695 = vrcp.pop %v1383
        %v1696 = vrcp.pop %v1386
        %v1697 = vrcp.pop %v1389
        %v1698 = vrcp.pop %v1392
        %v1699 = vmul.f32 %v1588, %v1667
        %v1700 = vmul.f32 %v1590, %v1668
        %v1701 = vmul.f32 %v1593, %v1669
        %v1702 = vmul.f32 %v1595, %v1670
        %v1703 = vmul.f32 %v1598, %v1671
        %v1704 = vmul.f32 %v1600, %v1672
        %v1705 = vmul.f32 %v1603, %v1673
        %v1706 = vmul.f32 %v1605, %v1674
        %v1707 = vmul.f32 %v1608, %v1675
        %v1708 = vmul.f32 %v1610, %v1676
        %v1709 = vmul.f32 %v1613, %v1677
        %v1710 = vmul.f32 %v1615, %v1678
        %v1711 = vmul.f32 %v1618, %v1679
        %v1712 = vmul.f32 %v1620, %v1680
        %v1713 = vmul.f32 %v1623, %v1681
        %v1714 = vmul.f32 %v1625, %v1682
        %v1715 = vmul.f32 %v1628, %v1683
        %v1716 = vmul.f32 %v1630, %v1684
        %v1717 = vmul.f32 %v1633, %v1685
        %v1718 = vmul.f32 %v1635, %v1686
        %v1719 = vmul.f32 %v1638, %v1687
        %v1720 = vmul.f32 %v1640, %v1688
        %v1721 = vmul.f32 %v1643, %v1689
        %v1722 = vmul.f32 %v1645, %v1690
        %v1723 = vmul.f32 %v1648, %v1691
        %v1724 = vmul.f32 %v1650, %v1692
        %v1725 = vmul.f32 %v1653, %v1693
        %v1726 = vmul.f32 %v1655, %v1694
        %v1727 = vmul.f32 %v1658, %v1695
        %v1728 = vmul.f32 %v1660, %v1696
        %v1729 = vmul.f32 %v1663, %v1697
        %v1730 = vmul.f32 %v1665, %v1698
        %1731 = vxpose.xlu0.b32.start [1/16] %v1699, 128
        %1732 = vxpose.xlu0.b32.cont [2/16] %v1700, 128
        %1733 = vxpose.xlu0.b32.cont [3/16] %v1701, 128
        %1734 = vxpose.xlu0.b32.cont [4/16] %v1702, 128
        %1735 = vxpose.xlu0.b32.cont [5/16] %v1703, 128
        %1736 = vxpose.xlu0.b32.cont [6/16] %v1704, 128
        %1737 = vxpose.xlu0.b32.cont [7/16] %v1705, 128
        %1738 = vxpose.xlu0.b32.cont [8/16] %v1706, 128
        %1739 = vxpose.xlu0.b32.cont [9/16] %v1707, 128
        %1740 = vxpose.xlu0.b32.cont [10/16] %v1708, 128
        %1741 = vxpose.xlu0.b32.cont [11/16] %v1709, 128
        %1742 = vxpose.xlu0.b32.cont [12/16] %v1710, 128
        %1743 = vxpose.xlu0.b32.cont [13/16] %v1711, 128
        %1744 = vxpose.xlu0.b32.cont [14/16] %v1712, 128
        %1745 = vxpose.xlu0.b32.cont [15/16] %v1713, 128
        %1746 = vxpose.xlu0.b32.end [16/16] %v1714, 128
        %v1747 = vpop.trf.xlu0
        %v1748 = vpop.trf.xlu0
        %v1749 = vpop.trf.xlu0
        %v1750 = vpop.trf.xlu0
        %v1751 = vpop.trf.xlu0
        %v1752 = vpop.trf.xlu0
        %v1753 = vpop.trf.xlu0
        %v1754 = vpop.trf.xlu0
        %v1755 = vpop.trf.xlu0
        %v1756 = vpop.trf.xlu0
        %v1757 = vpop.trf.xlu0
        %v1758 = vpop.trf.xlu0
        %v1759 = vpop.trf.xlu0
        %v1760 = vpop.trf.xlu0
        %v1761 = vpop.trf.xlu0
        %v1762 = vpop.trf.xlu0
        %1763 = vxpose.xlu0.b32.start [1/16] %v1715, 128
        %1764 = vxpose.xlu0.b32.cont [2/16] %v1716, 128
        %1765 = vxpose.xlu0.b32.cont [3/16] %v1717, 128
        %1766 = vxpose.xlu0.b32.cont [4/16] %v1718, 128
        %1767 = vxpose.xlu0.b32.cont [5/16] %v1719, 128
        %1768 = vxpose.xlu0.b32.cont [6/16] %v1720, 128
        %1769 = vxpose.xlu0.b32.cont [7/16] %v1721, 128
        %1770 = vxpose.xlu0.b32.cont [8/16] %v1722, 128
        %1771 = vxpose.xlu0.b32.cont [9/16] %v1723, 128
        %1772 = vxpose.xlu0.b32.cont [10/16] %v1724, 128
        %1773 = vxpose.xlu0.b32.cont [11/16] %v1725, 128
        %1774 = vxpose.xlu0.b32.cont [12/16] %v1726, 128
        %1775 = vxpose.xlu0.b32.cont [13/16] %v1727, 128
        %1776 = vxpose.xlu0.b32.cont [14/16] %v1728, 128
        %1777 = vxpose.xlu0.b32.cont [15/16] %v1729, 128
        %1778 = vxpose.xlu0.b32.end [16/16] %v1730, 128
        %v1779 = vpop.trf.xlu0
        %v1780 = vpop.trf.xlu0
        %v1781 = vpop.trf.xlu0
        %v1782 = vpop.trf.xlu0
        %v1783 = vpop.trf.xlu0
        %v1784 = vpop.trf.xlu0
        %v1785 = vpop.trf.xlu0
        %v1786 = vpop.trf.xlu0
        %v1787 = vpop.trf.xlu0
        %v1788 = vpop.trf.xlu0
        %v1789 = vpop.trf.xlu0
        %v1790 = vpop.trf.xlu0
        %v1791 = vpop.trf.xlu0
        %v1792 = vpop.trf.xlu0
        %v1793 = vpop.trf.xlu0
        %v1794 = vpop.trf.xlu0
        %1795 = vst [vmem:[%s205] sm:$0xff] %v1747
        %1796 = vst [vmem:[%s205 + $0x8] sm:$0xff] %v1779
        %s1797 = sand.u32 %s120, 1
        %s1798 = scalar_lea.sflag [#allocation3], %s1797
        %s1799 = sand.u32 %s120, 1
        %s1800 = smul.addr %s1799, 16
        %s1801 = scalar_lea.vmem [#allocation2], %s1800
        // Predicated region
        $region37: #{tpu_custom_call.1} parent=35 // pred_check
          %p1802 = pneg %p130
        $region38: #{tpu_custom_call.1} parent=35 // pred_check_branch
          %1804 = sbr.rel (%p1802) target = $region40
        $region39: #{tpu_custom_call.1} parent=35 // pred_region
          %1806 = vsyncadd %s1798, 0
          %s1807 = smul.addr %s18, 2
          %s1808 = smul.addr %s1807, 8
          %s1809 = scalar_lea.hbm %s4, %s1808
          %s1811 = sshll.u32 %s1801, 4
          %s1812 = int_to_ptr.vmem [resolvable:$true] %s1811
          %s1813 = sshll.u32 %s1809, 4
          %s1814 = int_to_ptr.hbm [resolvable:$true] %s1813
          %1816 = dma.vmem_to_hbm [thread:$0]  %s1812, 256, %s1814, %s1798
        $region40: #{tpu_custom_call.1} parent=35 // pred_fallthru
          _
      $region36: #{tpu_custom_call.1} parent=5 // pred_fallthru
        _
      %p1817 = scmp.le.s32.totalorder 2, %s13
      // Predicated region
      $region41: #{tpu_custom_call.1} parent=5 // pred_check
        %p1818 = pneg %p1817
      $region42: #{tpu_custom_call.1} parent=5 // pred_check_branch
        %1820 = sbr.rel (%p1818) target = $region44
      $region43: #{tpu_custom_call.1} parent=5 // pred_region
        %s1821 = ssub.s32 %s13, 2
        // Predicated region
        $region45: #{tpu_custom_call.1} parent=43 // pred_check
          %p1822 = pneg %p136
        $region46: #{tpu_custom_call.1} parent=43 // pred_check_branch
          %1824 = sbr.rel (%p1822) target = $region48
        $region47: #{tpu_custom_call.1} parent=43 // pred_region
          %s1825 = sand.u32 %s121, 1
          %s1826 = scalar_lea.sflag [#allocation3], %s1825
          %s1827 = sand.u32 %s121, 1
          %s1828 = smul.addr %s1827, 16
          %s1829 = scalar_lea.vmem [#allocation2], %s1828
          %1831 = dma.done %s1826, 256
        $region48: #{tpu_custom_call.1} parent=43 // pred_fallthru
          _
      $region44: #{tpu_custom_call.1} parent=5 // pred_fallthru
        _
    $region6: #{tpu_custom_call.1} parent=1 // loop_footer
      %s17 = sadd.s32 1, %s13
    $region7: #{tpu_custom_call.1} parent=1 // loop_footer_branch
      %12 = sbr.rel target = $region3
    $region8: #{tpu_custom_call.1} parent=1 // loop_exit
      _
    %1832 = vsyncpa [#allocation3], 1
    %s1833 = scalar_lea.sflag [#allocation3], 1
    %1834 = vsyncpa %s1833, 1

</llo_original>
